<compile_context>
chip_gen: v6e
topology: v6e:2x2x1
jax: 0.10.0
libtpu: 0.0.40
codegen_flags: <defaults>
</compile_context>

<pallas_src>
import jax
import jax.numpy as jnp
from jax.experimental import pallas as pl
from jax.experimental.pallas import tpu as pltpu

LRELU_SLOPE = 0.2


# ----------------------------------------------------------------------------
# Static shape bookkeeping
# ----------------------------------------------------------------------------
def _layer_metas(params, H0):
    metas = []
    H = H0
    convs = list(params['convs']) + [params['conv_post']]
    strides = list(params['strides']) + [1]
    for (w, _), s in zip(convs, strides):
        cout, cin, K, _ = w.shape
        pad = (K - 1) // 2
        Ho = (H + 2 * pad - K) // s + 1
        metas.append(dict(K=int(K), s=int(s), pad=int(pad), Hin=int(H),
                          Hp=int(H + 2 * pad), Ho=int(Ho),
                          cin=int(cin), cout=int(cout)))
        H = Ho
    return metas


def _round8(v):
    return ((v + 7) // 8) * 8


def _vmem_bytes_estimate(metas, NB, Hp0):
    """Rough VMEM footprint (lane/sublane padded) for NB sequences per step."""
    def tile_bytes(rows, cols):
        return _round8(max(rows, 1)) * (((max(cols, 1) + 127) // 128) * 128) * 4

    total = 0
    total += 2 * Hp0 * tile_bytes(NB, 1)                  # input block, x2 buf
    for m in metas[1:]:                                   # resident activations
        total += m['Hp'] * tile_bytes(NB, m['cin'])
    for m in metas:                                       # output blocks, x2 buf
        total += 2 * tile_bytes(m['cout'], m['Ho'] * NB)
    total += 256 * 1024                                   # weights / biases
    return total


def _choose_nb(N, metas, Hp0, nb_max=32, vmem_budget=20 * 1024 * 1024):
    nb = min(_round8(nb_max), _round8(max(N, 1)))
    if N > 8:
        # Prefer >= 2 grid blocks so the "parallel" axis can balance v7x's
        # two TensorCores.
        nb = min(nb, _round8(-(-N // 2)))
    nb = max(nb, 8)
    while nb > 8 and _vmem_bytes_estimate(metas, nb, Hp0) > vmem_budget:
        nb -= 8
    return nb


# ----------------------------------------------------------------------------
# Fused kernel
# ----------------------------------------------------------------------------
def _make_fused_kernel(cfgs, NB):
    L = len(cfgs)                      # 6 = 5 convs + conv_post

    def kernel(*refs):
        x_ref = refs[0]                                    # (Hp0, NB, 1)
        w_flat = [refs[1 + 4 * i + 0] for i in range(L)]   # (K*cin, cout)
        w_tr   = [refs[1 + 4 * i + 1] for i in range(L)]   # (cout, K*cin)
        b_row  = [refs[1 + 4 * i + 2] for i in range(L)]   # (1, cout)
        b_col  = [refs[1 + 4 * i + 3] for i in range(L)]   # (cout, 1)
        o0 = 1 + 4 * L
        out_refs = list(refs[o0:o0 + L])                   # (cout, Ho*NB) each
        buf_refs = list(refs[o0 + L:o0 + L + (L - 1)])     # (Hp, NB, cin) each

        src = x_ref
        for li, cfg in enumerate(cfgs):
            K, s, Ho = cfg['K'], cfg['s'], cfg['Ho']
            cin, cout = cfg['cin'], cfg['cout']
            M = Ho * NB

            # ---- gather the K taps, fold into one (M, K*cin) operand -------
            taps = []
            for k in range(K):                              # unrolled (K <= 5)
                if Ho == 1:
                    t3 = src[k:k + 1, :, :]
                elif s == 1:
                    t3 = src[k:k + Ho, :, :]
                else:
                    t3 = src[pl.ds(k, Ho, stride=s), :, :]  # outer-dim stride
                # (Ho, NB, cin) -> (Ho*NB, cin): NB % 8 == 0 -> pure re-index.
                taps.append(t3.reshape(M, cin))
            lhs = taps[0] if K == 1 else jnp.concatenate(taps, axis=1)

            # ---- channel-first result (cout, M): lane-dense HBM store ------
            y_t = jax.lax.dot_general(
                w_tr[li][...], lhs,
                dimension_numbers=(((1,), (1,)), ((), ())),
                preferred_element_type=jnp.float32) + b_col[li][...]
            out_refs[li][...] = y_t            # pre-activation fmap / logits

            # ---- channel-last result (M, cout): feeds the next layer -------
            if li < L - 1:
                y = jnp.dot(lhs, w_flat[li][...],
                            preferred_element_type=jnp.float32) + b_row[li][...]
                ya = jnp.where(y > 0.0, y, LRELU_SLOPE * y)   # stays in VMEM

                nxt = buf_refs[li]
                pad_n = cfgs[li + 1]['pad']
                hp_n = cfgs[li + 1]['Hp']
                if pad_n > 0:
                    # Only the halo rows are zeroed (not the full buffer).
                    zer = jnp.zeros((pad_n, NB, cout), jnp.float32)
                    nxt[0:pad_n, :, :] = zer
                    nxt[hp_n - pad_n:hp_n, :, :] = zer
                nxt[pad_n:pad_n + Ho, :, :] = ya.reshape(Ho, NB, cout)
                src = nxt

    return kernel


# ----------------------------------------------------------------------------
# Parameters (weight_norm at init == plain weight)
# ----------------------------------------------------------------------------
def init_discriminator_p_params(key, ch=4, max_ch=32, kernel_size=5, stride=3):
    ch1, ch2, ch3, ch4 = ch, ch * 4, min(max_ch, ch * 16), min(max_ch, ch * 32)
    layer_io = [(1, ch1, kernel_size), (ch1, ch2, kernel_size),
                (ch2, ch3, kernel_size), (ch3, ch4, kernel_size),
                (ch4, ch4, 5)]
    strides = [stride, stride, stride, stride, 1]
    params = {'convs': [], 'strides': [], 'conv_post': None}
    keys = jax.random.split(key, 2 * (len(layer_io) + 1))
    ki = 0
    for (cin, cout, k), s in zip(layer_io, strides):
        w = 0.1 * jax.random.normal(keys[ki], (cout, cin, k, 1), jnp.float32)
        bvec = 0.01 * jax.random.normal(keys[ki + 1], (cout,), jnp.float32)
        ki += 2
        params['convs'].append((w, bvec))
        params['strides'].append(s)
    w = 0.1 * jax.random.normal(keys[ki], (1, ch4, 3, 1), jnp.float32)
    bvec = 0.01 * jax.random.normal(keys[ki + 1], (1,), jnp.float32)
    params['conv_post'] = (w, bvec)
    return params


# ----------------------------------------------------------------------------
# Forward (wrapper around one pallas_call)
# ----------------------------------------------------------------------------
def discriminator_p_forward(x, params, period, nb_max=32):
    """x: (B, 1, T) float32.  Returns (flattened_logits, fmap) like PyTorch."""
    b, c, t = x.shape
    assert c == 1
    if t % period != 0:
        n_pad = period - t % period
        x = jnp.pad(x, ((0, 0), (0, 0), (0, n_pad)), mode='reflect')
        t = t + n_pad
    W = period
    H0 = t // period
    N = b * W                                   # independent 1-D sequences

    metas = _layer_metas(params, H0)
    pad0 = metas[0]['pad']
    Hp0 = metas[0]['Hp']

    NB = _choose_nb(N, metas, Hp0, nb_max=nb_max)
    G = -(-N // NB)
    N_pad = G * NB

    # (B,1,T) -> (B,H0,W) -> (H0,B,W) -> (H0,N): column n = b*W + w.
    xs = x.reshape(b, H0, W).transpose(1, 0, 2).reshape(H0, N).astype(jnp.float32)
    # Zero-pad: conv halo along H; dummy (all-zero) sequences along N.
    xs = jnp.pad(xs, ((pad0, pad0), (0, N_pad - N)))[..., None]  # (Hp0,N_pad,1)

    convs = list(params['convs']) + [params['conv_post']]

    inputs = [xs]
    in_specs = [pl.BlockSpec((Hp0, NB, 1), lambda g: (0, g, 0))]
    for (w, bias), m in zip(convs, metas):
        K, cin, cout = m['K'], m['cin'], m['cout']
        w3 = w.reshape(cout, cin, K).astype(jnp.float32)
        # Row/col ordering (k, c) -> k*cin + c matches the in-kernel tap concat.
        w_flat = jnp.transpose(w3, (2, 1, 0)).reshape(K * cin, cout)
        w_tr = jnp.transpose(w3, (0, 2, 1)).reshape(cout, K * cin)
        b_row = bias.reshape(1, cout).astype(jnp.float32)
        b_col = bias.reshape(cout, 1).astype(jnp.float32)
        inputs += [w_flat, w_tr, b_row, b_col]
        in_specs += [
            pl.BlockSpec((K * cin, cout), lambda g: (0, 0)),
            pl.BlockSpec((cout, K * cin), lambda g: (0, 0)),
            pl.BlockSpec((1, cout), lambda g: (0, 0)),
            pl.BlockSpec((cout, 1), lambda g: (0, 0)),
        ]

    out_specs, out_shapes = [], []
    for m in metas:
        M = m['Ho'] * NB
        out_specs.append(pl.BlockSpec((None, m['cout'], M), lambda g: (g, 0, 0)))
        out_shapes.append(jax.ShapeDtypeStruct((G, m['cout'], M), jnp.float32))

    # Per-layer resident input buffers (layers 2..6); activations never
    # round-trip through HBM.
    scratch = [pltpu.VMEM((m['Hp'], NB, m['cin']), jnp.float32)
               for m in metas[1:]]

    vmem_need = _vmem_bytes_estimate(metas, NB, Hp0)
    vmem_limit = int(min(56 * 1024 * 1024, max(2 * vmem_need, 16 * 1024 * 1024)))

    outs = pl.pallas_call(
        _make_fused_kernel(metas, NB),
        grid=(G,),
        in_specs=in_specs,
        out_specs=out_specs,
        out_shape=out_shapes,
        scratch_shapes=scratch,
        compiler_params=pltpu.CompilerParams(
            dimension_semantics=("parallel",),
            vmem_limit_bytes=vmem_limit),
    )(*inputs)

    # One-time layout conversion of the required outputs to NCHW / flat.
    def to_nchw(o, m):
        o = o.reshape(G, m['cout'], m['Ho'], NB).transpose(1, 2, 0, 3)
        o = o.reshape(m['cout'], m['Ho'], N_pad)[:, :, :N]
        o = o.reshape(m['cout'], m['Ho'], b, W).transpose(2, 0, 1, 3)
        return o                                            # (B, cout, Ho, W)

    fmap = [to_nchw(o, m) for o, m in zip(outs[:-1], metas[:-1])]
    mL = metas[-1]
    out = to_nchw(outs[-1], mL).reshape(b, mL['Ho'] * W)    # flatten(1, -1)
    return out, fmap


# ----------------------------------------------------------------------------
# Pure-JAX reference (mirrors the PyTorch forward exactly)
# ----------------------------------------------------------------------------
def _reference_forward(x, params, period):
    b, c, t = x.shape
    if t % period != 0:
        n_pad = period - t % period
        x = jnp.pad(x, ((0, 0), (0, 0), (0, n_pad)), mode='reflect')
        t = t + n_pad
    h = x.reshape(b, 1, t // period, period)
    fmap = []
    convs = list(params['convs']) + [params['conv_post']]
    strides = list(params['strides']) + [1]
    for i, ((w, bias), s) in enumerate(zip(convs, strides)):
        K = w.shape[2]
        pad = (K - 1) // 2
        h = jax.lax.conv_general_dilated(
            h, w, window_strides=(s, 1), padding=((pad, pad), (0, 0)),
            dimension_numbers=('NCHW', 'OIHW', 'NCHW'))
        h = h + bias.reshape(1, -1, 1, 1)
        if i < len(convs) - 1:
            fmap.append(h)
            h = jnp.where(h > 0.0, h, LRELU_SLOPE * h)
    return h.reshape(b, -1), fmap


if __name__ == "__main__":
    key = jax.random.PRNGKey(0)
    k_w, k_x = jax.random.split(key)

    period = 3
    B, C, T = 2, 1, 50          # T % period != 0 -> exercises the reflect pad
    x = jax.random.normal(k_x, (B, C, T), jnp.float32)

    params = init_discriminator_p_params(k_w, ch=4, max_ch=32, kernel_size=5)

    out, fmap = discriminator_p_forward(x, params, period)
    out = jax.block_until_ready(out)
    fmap = [jax.block_until_ready(f) for f in fmap]

    ref_out, ref_fmap = _reference_forward(x, params, period)
    assert out.shape == ref_out.shape and out.ndim == 2
    assert len(fmap) == len(ref_fmap) == 5
    for f, rf in zip(fmap, ref_fmap):
        assert f.shape == rf.shape
        assert float(jnp.max(jnp.abs(f - rf))) < 1e-3
    assert float(jnp.max(jnp.abs(out - ref_out))) < 1e-3

    print("KERNEL_OK")
</pallas_src>

<mosaic_0001>
module attributes {stable_mosaic.version = 11 : i64} {
  func.func @kernel(%arg0: i32, %arg1: memref<21x8x1xf32, #tpu.memory_space<vmem>>, %arg2: memref<5x4xf32, #tpu.memory_space<vmem>>, %arg3: memref<4x5xf32, #tpu.memory_space<vmem>>, %arg4: memref<1x4xf32, #tpu.memory_space<vmem>>, %arg5: memref<4x1xf32, #tpu.memory_space<vmem>>, %arg6: memref<20x16xf32, #tpu.memory_space<vmem>>, %arg7: memref<16x20xf32, #tpu.memory_space<vmem>>, %arg8: memref<1x16xf32, #tpu.memory_space<vmem>>, %arg9: memref<16x1xf32, #tpu.memory_space<vmem>>, %arg10: memref<80x32xf32, #tpu.memory_space<vmem>>, %arg11: memref<32x80xf32, #tpu.memory_space<vmem>>, %arg12: memref<1x32xf32, #tpu.memory_space<vmem>>, %arg13: memref<32x1xf32, #tpu.memory_space<vmem>>, %arg14: memref<160x32xf32, #tpu.memory_space<vmem>>, %arg15: memref<32x160xf32, #tpu.memory_space<vmem>>, %arg16: memref<1x32xf32, #tpu.memory_space<vmem>>, %arg17: memref<32x1xf32, #tpu.memory_space<vmem>>, %arg18: memref<160x32xf32, #tpu.memory_space<vmem>>, %arg19: memref<32x160xf32, #tpu.memory_space<vmem>>, %arg20: memref<1x32xf32, #tpu.memory_space<vmem>>, %arg21: memref<32x1xf32, #tpu.memory_space<vmem>>, %arg22: memref<96x1xf32, #tpu.memory_space<vmem>>, %arg23: memref<1x96xf32, #tpu.memory_space<vmem>>, %arg24: memref<1x1xf32, #tpu.memory_space<vmem>>, %arg25: memref<1x1xf32, #tpu.memory_space<vmem>>, %arg26: memref<1x4x48xf32, #tpu.memory_space<vmem>>, %arg27: memref<1x16x16xf32, #tpu.memory_space<vmem>>, %arg28: memref<1x32x8xf32, #tpu.memory_space<vmem>>, %arg29: memref<1x32x8xf32, #tpu.memory_space<vmem>>, %arg30: memref<1x32x8xf32, #tpu.memory_space<vmem>>, %arg31: memref<1x1x8xf32, #tpu.memory_space<vmem>>, %arg32: memref<10x8x4xf32, #tpu.memory_space<vmem>>, %arg33: memref<6x8x16xf32, #tpu.memory_space<vmem>>, %arg34: memref<5x8x32xf32, #tpu.memory_space<vmem>>, %arg35: memref<5x8x32xf32, #tpu.memory_space<vmem>>, %arg36: memref<3x8x32xf32, #tpu.memory_space<vmem>>) attributes {dimension_semantics = [#tpu.dimension_semantics<parallel>], iteration_bounds = array<i64: 1>, scalar_prefetch = 0 : i64, scratch_operands = 5 : i64, tpu.core_type = #tpu.core_type<tc>, window_params = [{transform_indices = @transform_0, window_bounds = array<i64: 21, 8, 1>}, {pipeline_mode = #tpu.pipeline_mode<synchronous>, transform_indices = @transform_1, window_bounds = array<i64: 5, 4>}, {pipeline_mode = #tpu.pipeline_mode<synchronous>, transform_indices = @transform_2, window_bounds = array<i64: 4, 5>}, {pipeline_mode = #tpu.pipeline_mode<synchronous>, transform_indices = @transform_3, window_bounds = array<i64: 1, 4>}, {pipeline_mode = #tpu.pipeline_mode<synchronous>, transform_indices = @transform_4, window_bounds = array<i64: 4, 1>}, {pipeline_mode = #tpu.pipeline_mode<synchronous>, transform_indices = @transform_5, window_bounds = array<i64: 20, 16>}, {pipeline_mode = #tpu.pipeline_mode<synchronous>, transform_indices = @transform_6, window_bounds = array<i64: 16, 20>}, {pipeline_mode = #tpu.pipeline_mode<synchronous>, transform_indices = @transform_7, window_bounds = array<i64: 1, 16>}, {pipeline_mode = #tpu.pipeline_mode<synchronous>, transform_indices = @transform_8, window_bounds = array<i64: 16, 1>}, {pipeline_mode = #tpu.pipeline_mode<synchronous>, transform_indices = @transform_9, window_bounds = array<i64: 80, 32>}, {pipeline_mode = #tpu.pipeline_mode<synchronous>, transform_indices = @transform_10, window_bounds = array<i64: 32, 80>}, {pipeline_mode = #tpu.pipeline_mode<synchronous>, transform_indices = @transform_11, window_bounds = array<i64: 1, 32>}, {pipeline_mode = #tpu.pipeline_mode<synchronous>, transform_indices = @transform_12, window_bounds = array<i64: 32, 1>}, {pipeline_mode = #tpu.pipeline_mode<synchronous>, transform_indices = @transform_13, window_bounds = array<i64: 160, 32>}, {pipeline_mode = #tpu.pipeline_mode<synchronous>, transform_indices = @transform_14, window_bounds = array<i64: 32, 160>}, {pipeline_mode = #tpu.pipeline_mode<synchronous>, transform_indices = @transform_15, window_bounds = array<i64: 1, 32>}, {pipeline_mode = #tpu.pipeline_mode<synchronous>, transform_indices = @transform_16, window_bounds = array<i64: 32, 1>}, {pipeline_mode = #tpu.pipeline_mode<synchronous>, transform_indices = @transform_17, window_bounds = array<i64: 160, 32>}, {pipeline_mode = #tpu.pipeline_mode<synchronous>, transform_indices = @transform_18, window_bounds = array<i64: 32, 160>}, {pipeline_mode = #tpu.pipeline_mode<synchronous>, transform_indices = @transform_19, window_bounds = array<i64: 1, 32>}, {pipeline_mode = #tpu.pipeline_mode<synchronous>, transform_indices = @transform_20, window_bounds = array<i64: 32, 1>}, {pipeline_mode = #tpu.pipeline_mode<synchronous>, transform_indices = @transform_21, window_bounds = array<i64: 96, 1>}, {pipeline_mode = #tpu.pipeline_mode<synchronous>, transform_indices = @transform_22, window_bounds = array<i64: 1, 96>}, {pipeline_mode = #tpu.pipeline_mode<synchronous>, transform_indices = @transform_23, window_bounds = array<i64: 1, 1>}, {pipeline_mode = #tpu.pipeline_mode<synchronous>, transform_indices = @transform_24, window_bounds = array<i64: 1, 1>}, {transform_indices = @transform_25, window_bounds = array<i64: 1, 4, 48>}, {transform_indices = @transform_26, window_bounds = array<i64: 1, 16, 16>}, {transform_indices = @transform_27, window_bounds = array<i64: 1, 32, 8>}, {transform_indices = @transform_28, window_bounds = array<i64: 1, 32, 8>}, {transform_indices = @transform_29, window_bounds = array<i64: 1, 32, 8>}, {transform_indices = @transform_30, window_bounds = array<i64: 1, 1, 8>}]} {
    %c0 = arith.constant 0 : index
    %c0_0 = arith.constant 0 : index
    %c0_1 = arith.constant 0 : index
    %0 = tpu.strided_load %arg1[%c0, %c0_0, %c0_1] {strides = array<i32: 3, 1, 1>} : memref<21x8x1xf32, #tpu.memory_space<vmem>>, vector<6x8x1xf32>
    %1 = vector.shape_cast %0 : vector<6x8x1xf32> to vector<48x1xf32>
    %c1 = arith.constant 1 : index
    %c0_2 = arith.constant 0 : index
    %c0_3 = arith.constant 0 : index
    %2 = tpu.strided_load %arg1[%c1, %c0_2, %c0_3] {strides = array<i32: 3, 1, 1>} : memref<21x8x1xf32, #tpu.memory_space<vmem>>, vector<6x8x1xf32>
    %3 = vector.shape_cast %2 : vector<6x8x1xf32> to vector<48x1xf32>
    %c2 = arith.constant 2 : index
    %c0_4 = arith.constant 0 : index
    %c0_5 = arith.constant 0 : index
    %4 = tpu.strided_load %arg1[%c2, %c0_4, %c0_5] {strides = array<i32: 3, 1, 1>} : memref<21x8x1xf32, #tpu.memory_space<vmem>>, vector<6x8x1xf32>
    %5 = vector.shape_cast %4 : vector<6x8x1xf32> to vector<48x1xf32>
    %c3 = arith.constant 3 : index
    %c0_6 = arith.constant 0 : index
    %c0_7 = arith.constant 0 : index
    %6 = tpu.strided_load %arg1[%c3, %c0_6, %c0_7] {strides = array<i32: 3, 1, 1>} : memref<21x8x1xf32, #tpu.memory_space<vmem>>, vector<6x8x1xf32>
    %7 = vector.shape_cast %6 : vector<6x8x1xf32> to vector<48x1xf32>
    %c4 = arith.constant 4 : index
    %c0_8 = arith.constant 0 : index
    %c0_9 = arith.constant 0 : index
    %8 = tpu.strided_load %arg1[%c4, %c0_8, %c0_9] {strides = array<i32: 3, 1, 1>} : memref<21x8x1xf32, #tpu.memory_space<vmem>>, vector<6x8x1xf32>
    %9 = vector.shape_cast %8 : vector<6x8x1xf32> to vector<48x1xf32>
    %10 = tpu.concatenate %1, %3, %5, %7, %9 in 1 : vector<48x1xf32>, vector<48x1xf32>, vector<48x1xf32>, vector<48x1xf32>, vector<48x1xf32> -> vector<48x5xf32>
    %c0_10 = arith.constant 0 : index
    %c0_11 = arith.constant 0 : index
    %11 = vector.load %arg3[%c0_10, %c0_11] : memref<4x5xf32, #tpu.memory_space<vmem>>, vector<4x5xf32>
    %cst = arith.constant dense<0.000000e+00> : vector<4x48xf32>
    %12 = tpu.matmul %11, %10, %cst {dimension_numbers = #tpu.dot_dimension_numbers<[1], [1], [0], [0], [0, 0, 1, 0], [], []>} : vector<4x5xf32>, vector<48x5xf32>, vector<4x48xf32> -> vector<4x48xf32>
    %c0_12 = arith.constant 0 : index
    %c0_13 = arith.constant 0 : index
    %13 = vector.load %arg5[%c0_12, %c0_13] : memref<4x1xf32, #tpu.memory_space<vmem>>, vector<4x1xf32>
    %14 = vector.broadcast %13 : vector<4x1xf32> to vector<4x48xf32>
    %15 = arith.addf %12, %14 : vector<4x48xf32>
    %c0_14 = arith.constant 0 : index
    %c0_15 = arith.constant 0 : index
    %c0_16 = arith.constant 0 : index
    %16 = vector.load %arg26[%c0_14, %c0_15, %c0_16] : memref<1x4x48xf32, #tpu.memory_space<vmem>>, vector<1x4x48xf32>
    %17 = vector.shape_cast %16 : vector<1x4x48xf32> to vector<4x48xf32>
    %18 = vector.shape_cast %15 : vector<4x48xf32> to vector<1x4x48xf32>
    tpu.vector_store %arg26[%c0_14, %c0_15, %c0_16], %18 {strides = array<i32>} : memref<1x4x48xf32, #tpu.memory_space<vmem>>, vector<1x4x48xf32>,
    %c0_17 = arith.constant 0 : index
    %c0_18 = arith.constant 0 : index
    %19 = vector.load %arg2[%c0_17, %c0_18] : memref<5x4xf32, #tpu.memory_space<vmem>>, vector<5x4xf32>
    %cst_19 = arith.constant dense<0.000000e+00> : vector<48x4xf32>
    %20 = tpu.matmul %10, %19, %cst_19 {dimension_numbers = #tpu.dot_dimension_numbers<[1], [0], [0], [1], [0, 0, 1, 1], [], []>} : vector<48x5xf32>, vector<5x4xf32>, vector<48x4xf32> -> vector<48x4xf32>
    %c0_20 = arith.constant 0 : index
    %c0_21 = arith.constant 0 : index
    %21 = vector.load %arg4[%c0_20, %c0_21] : memref<1x4xf32, #tpu.memory_space<vmem>>, vector<1x4xf32>
    %22 = vector.broadcast %21 : vector<1x4xf32> to vector<48x4xf32>
    %23 = arith.addf %20, %22 : vector<48x4xf32>
    %cst_22 = arith.constant 0.000000e+00 : f32
    %24 = vector.broadcast %cst_22 : f32 to vector<48x4xf32>
    %25 = arith.cmpf ogt, %23, %24 : vector<48x4xf32>
    %cst_23 = arith.constant 2.000000e-01 : f32
    %26 = vector.broadcast %cst_23 : f32 to vector<48x4xf32>
    %27 = arith.mulf %26, %23 : vector<48x4xf32>
    %28 = arith.select %25, %23, %27 : vector<48x4xi1>, vector<48x4xf32>
    %cst_24 = arith.constant 0.000000e+00 : f32
    %29 = vector.broadcast %cst_24 : f32 to vector<2x8x4xf32>
    %c0_25 = arith.constant 0 : index
    %c0_26 = arith.constant 0 : index
    %c0_27 = arith.constant 0 : index
    %30 = vector.load %arg32[%c0_25, %c0_26, %c0_27] : memref<10x8x4xf32, #tpu.memory_space<vmem>>, vector<2x8x4xf32>
    tpu.vector_store %arg32[%c0_25, %c0_26, %c0_27], %29 {strides = array<i32>} : memref<10x8x4xf32, #tpu.memory_space<vmem>>, vector<2x8x4xf32>,
    %c8 = arith.constant 8 : index
    %c0_28 = arith.constant 0 : index
    %c0_29 = arith.constant 0 : index
    %31 = vector.load %arg32[%c8, %c0_28, %c0_29] : memref<10x8x4xf32, #tpu.memory_space<vmem>>, vector<2x8x4xf32>
    tpu.vector_store %arg32[%c8, %c0_28, %c0_29], %29 {strides = array<i32>} : memref<10x8x4xf32, #tpu.memory_space<vmem>>, vector<2x8x4xf32>,
    %32 = vector.shape_cast %28 : vector<48x4xf32> to vector<6x8x4xf32>
    %c2_30 = arith.constant 2 : index
    %c0_31 = arith.constant 0 : index
    %c0_32 = arith.constant 0 : index
    %33 = vector.load %arg32[%c2_30, %c0_31, %c0_32] : memref<10x8x4xf32, #tpu.memory_space<vmem>>, vector<6x8x4xf32>
    tpu.vector_store %arg32[%c2_30, %c0_31, %c0_32], %32 {strides = array<i32>} : memref<10x8x4xf32, #tpu.memory_space<vmem>>, vector<6x8x4xf32>,
    %c0_33 = arith.constant 0 : index
    %c0_34 = arith.constant 0 : index
    %c0_35 = arith.constant 0 : index
    %34 = tpu.strided_load %arg32[%c0_33, %c0_34, %c0_35] {strides = array<i32: 3, 1, 1>} : memref<10x8x4xf32, #tpu.memory_space<vmem>>, vector<2x8x4xf32>
    %35 = vector.shape_cast %34 : vector<2x8x4xf32> to vector<16x4xf32>
    %c1_36 = arith.constant 1 : index
    %c0_37 = arith.constant 0 : index
    %c0_38 = arith.constant 0 : index
    %36 = tpu.strided_load %arg32[%c1_36, %c0_37, %c0_38] {strides = array<i32: 3, 1, 1>} : memref<10x8x4xf32, #tpu.memory_space<vmem>>, vector<2x8x4xf32>
    %37 = vector.shape_cast %36 : vector<2x8x4xf32> to vector<16x4xf32>
    %c2_39 = arith.constant 2 : index
    %c0_40 = arith.constant 0 : index
    %c0_41 = arith.constant 0 : index
    %38 = tpu.strided_load %arg32[%c2_39, %c0_40, %c0_41] {strides = array<i32: 3, 1, 1>} : memref<10x8x4xf32, #tpu.memory_space<vmem>>, vector<2x8x4xf32>
    %39 = vector.shape_cast %38 : vector<2x8x4xf32> to vector<16x4xf32>
    %c3_42 = arith.constant 3 : index
    %c0_43 = arith.constant 0 : index
    %c0_44 = arith.constant 0 : index
    %40 = tpu.strided_load %arg32[%c3_42, %c0_43, %c0_44] {strides = array<i32: 3, 1, 1>} : memref<10x8x4xf32, #tpu.memory_space<vmem>>, vector<2x8x4xf32>
    %41 = vector.shape_cast %40 : vector<2x8x4xf32> to vector<16x4xf32>
    %c4_45 = arith.constant 4 : index
    %c0_46 = arith.constant 0 : index
    %c0_47 = arith.constant 0 : index
    %42 = tpu.strided_load %arg32[%c4_45, %c0_46, %c0_47] {strides = array<i32: 3, 1, 1>} : memref<10x8x4xf32, #tpu.memory_space<vmem>>, vector<2x8x4xf32>
    %43 = vector.shape_cast %42 : vector<2x8x4xf32> to vector<16x4xf32>
    %44 = tpu.concatenate %35, %37, %39, %41, %43 in 1 : vector<16x4xf32>, vector<16x4xf32>, vector<16x4xf32>, vector<16x4xf32>, vector<16x4xf32> -> vector<16x20xf32>
    %c0_48 = arith.constant 0 : index
    %c0_49 = arith.constant 0 : index
    %45 = vector.load %arg7[%c0_48, %c0_49] : memref<16x20xf32, #tpu.memory_space<vmem>>, vector<16x20xf32>
    %cst_50 = arith.constant dense<0.000000e+00> : vector<16x16xf32>
    %46 = tpu.matmul %45, %44, %cst_50 {dimension_numbers = #tpu.dot_dimension_numbers<[1], [1], [0], [0], [0, 0, 1, 0], [], []>} : vector<16x20xf32>, vector<16x20xf32>, vector<16x16xf32> -> vector<16x16xf32>
    %c0_51 = arith.constant 0 : index
    %c0_52 = arith.constant 0 : index
    %47 = vector.load %arg9[%c0_51, %c0_52] : memref<16x1xf32, #tpu.memory_space<vmem>>, vector<16x1xf32>
    %48 = vector.broadcast %47 : vector<16x1xf32> to vector<16x16xf32>
    %49 = arith.addf %46, %48 : vector<16x16xf32>
    %c0_53 = arith.constant 0 : index
    %c0_54 = arith.constant 0 : index
    %c0_55 = arith.constant 0 : index
    %50 = vector.load %arg27[%c0_53, %c0_54, %c0_55] : memref<1x16x16xf32, #tpu.memory_space<vmem>>, vector<1x16x16xf32>
    %51 = vector.shape_cast %50 : vector<1x16x16xf32> to vector<16x16xf32>
    %52 = vector.shape_cast %49 : vector<16x16xf32> to vector<1x16x16xf32>
    tpu.vector_store %arg27[%c0_53, %c0_54, %c0_55], %52 {strides = array<i32>} : memref<1x16x16xf32, #tpu.memory_space<vmem>>, vector<1x16x16xf32>,
    %c0_56 = arith.constant 0 : index
    %c0_57 = arith.constant 0 : index
    %53 = vector.load %arg6[%c0_56, %c0_57] : memref<20x16xf32, #tpu.memory_space<vmem>>, vector<20x16xf32>
    %cst_58 = arith.constant dense<0.000000e+00> : vector<16x16xf32>
    %54 = tpu.matmul %44, %53, %cst_58 {dimension_numbers = #tpu.dot_dimension_numbers<[1], [0], [0], [1], [0, 0, 1, 1], [], []>} : vector<16x20xf32>, vector<20x16xf32>, vector<16x16xf32> -> vector<16x16xf32>
    %c0_59 = arith.constant 0 : index
    %c0_60 = arith.constant 0 : index
    %55 = vector.load %arg8[%c0_59, %c0_60] : memref<1x16xf32, #tpu.memory_space<vmem>>, vector<1x16xf32>
    %56 = vector.broadcast %55 : vector<1x16xf32> to vector<16x16xf32>
    %57 = arith.addf %54, %56 : vector<16x16xf32>
    %cst_61 = arith.constant 0.000000e+00 : f32
    %58 = vector.broadcast %cst_61 : f32 to vector<16x16xf32>
    %59 = arith.cmpf ogt, %57, %58 : vector<16x16xf32>
    %cst_62 = arith.constant 2.000000e-01 : f32
    %60 = vector.broadcast %cst_62 : f32 to vector<16x16xf32>
    %61 = arith.mulf %60, %57 : vector<16x16xf32>
    %62 = arith.select %59, %57, %61 : vector<16x16xi1>, vector<16x16xf32>
    %cst_63 = arith.constant 0.000000e+00 : f32
    %63 = vector.broadcast %cst_63 : f32 to vector<2x8x16xf32>
    %c0_64 = arith.constant 0 : index
    %c0_65 = arith.constant 0 : index
    %c0_66 = arith.constant 0 : index
    %64 = vector.load %arg33[%c0_64, %c0_65, %c0_66] : memref<6x8x16xf32, #tpu.memory_space<vmem>>, vector<2x8x16xf32>
    tpu.vector_store %arg33[%c0_64, %c0_65, %c0_66], %63 {strides = array<i32>} : memref<6x8x16xf32, #tpu.memory_space<vmem>>, vector<2x8x16xf32>,
    %c4_67 = arith.constant 4 : index
    %c0_68 = arith.constant 0 : index
    %c0_69 = arith.constant 0 : index
    %65 = vector.load %arg33[%c4_67, %c0_68, %c0_69] : memref<6x8x16xf32, #tpu.memory_space<vmem>>, vector<2x8x16xf32>
    tpu.vector_store %arg33[%c4_67, %c0_68, %c0_69], %63 {strides = array<i32>} : memref<6x8x16xf32, #tpu.memory_space<vmem>>, vector<2x8x16xf32>,
    %66 = vector.shape_cast %62 : vector<16x16xf32> to vector<2x8x16xf32>
    %c2_70 = arith.constant 2 : index
    %c0_71 = arith.constant 0 : index
    %c0_72 = arith.constant 0 : index
    %67 = vector.load %arg33[%c2_70, %c0_71, %c0_72] : memref<6x8x16xf32, #tpu.memory_space<vmem>>, vector<2x8x16xf32>
    tpu.vector_store %arg33[%c2_70, %c0_71, %c0_72], %66 {strides = array<i32>} : memref<6x8x16xf32, #tpu.memory_space<vmem>>, vector<2x8x16xf32>,
    %c0_73 = arith.constant 0 : index
    %c0_74 = arith.constant 0 : index
    %c0_75 = arith.constant 0 : index
    %68 = vector.load %arg33[%c0_73, %c0_74, %c0_75] : memref<6x8x16xf32, #tpu.memory_space<vmem>>, vector<1x8x16xf32>
    %69 = vector.shape_cast %68 : vector<1x8x16xf32> to vector<8x16xf32>
    %c1_76 = arith.constant 1 : index
    %c0_77 = arith.constant 0 : index
    %c0_78 = arith.constant 0 : index
    %70 = vector.load %arg33[%c1_76, %c0_77, %c0_78] : memref<6x8x16xf32, #tpu.memory_space<vmem>>, vector<1x8x16xf32>
    %71 = vector.shape_cast %70 : vector<1x8x16xf32> to vector<8x16xf32>
    %c2_79 = arith.constant 2 : index
    %c0_80 = arith.constant 0 : index
    %c0_81 = arith.constant 0 : index
    %72 = vector.load %arg33[%c2_79, %c0_80, %c0_81] : memref<6x8x16xf32, #tpu.memory_space<vmem>>, vector<1x8x16xf32>
    %73 = vector.shape_cast %72 : vector<1x8x16xf32> to vector<8x16xf32>
    %c3_82 = arith.constant 3 : index
    %c0_83 = arith.constant 0 : index
    %c0_84 = arith.constant 0 : index
    %74 = vector.load %arg33[%c3_82, %c0_83, %c0_84] : memref<6x8x16xf32, #tpu.memory_space<vmem>>, vector<1x8x16xf32>
    %75 = vector.shape_cast %74 : vector<1x8x16xf32> to vector<8x16xf32>
    %c4_85 = arith.constant 4 : index
    %c0_86 = arith.constant 0 : index
    %c0_87 = arith.constant 0 : index
    %76 = vector.load %arg33[%c4_85, %c0_86, %c0_87] : memref<6x8x16xf32, #tpu.memory_space<vmem>>, vector<1x8x16xf32>
    %77 = vector.shape_cast %76 : vector<1x8x16xf32> to vector<8x16xf32>
    %78 = tpu.concatenate %69, %71, %73, %75, %77 in 1 : vector<8x16xf32>, vector<8x16xf32>, vector<8x16xf32>, vector<8x16xf32>, vector<8x16xf32> -> vector<8x80xf32>
    %c0_88 = arith.constant 0 : index
    %c0_89 = arith.constant 0 : index
    %79 = vector.load %arg11[%c0_88, %c0_89] : memref<32x80xf32, #tpu.memory_space<vmem>>, vector<32x80xf32>
    %cst_90 = arith.constant dense<0.000000e+00> : vector<32x8xf32>
    %80 = tpu.matmul %79, %78, %cst_90 {dimension_numbers = #tpu.dot_dimension_numbers<[1], [1], [0], [0], [0, 0, 1, 0], [], []>} : vector<32x80xf32>, vector<8x80xf32>, vector<32x8xf32> -> vector<32x8xf32>
    %c0_91 = arith.constant 0 : index
    %c0_92 = arith.constant 0 : index
    %81 = vector.load %arg13[%c0_91, %c0_92] : memref<32x1xf32, #tpu.memory_space<vmem>>, vector<32x1xf32>
    %82 = vector.broadcast %81 : vector<32x1xf32> to vector<32x8xf32>
    %83 = arith.addf %80, %82 : vector<32x8xf32>
    %c0_93 = arith.constant 0 : index
    %c0_94 = arith.constant 0 : index
    %c0_95 = arith.constant 0 : index
    %84 = vector.load %arg28[%c0_93, %c0_94, %c0_95] : memref<1x32x8xf32, #tpu.memory_space<vmem>>, vector<1x32x8xf32>
    %85 = vector.shape_cast %84 : vector<1x32x8xf32> to vector<32x8xf32>
    %86 = vector.shape_cast %83 : vector<32x8xf32> to vector<1x32x8xf32>
    tpu.vector_store %arg28[%c0_93, %c0_94, %c0_95], %86 {strides = array<i32>} : memref<1x32x8xf32, #tpu.memory_space<vmem>>, vector<1x32x8xf32>,
    %c0_96 = arith.constant 0 : index
    %c0_97 = arith.constant 0 : index
    %87 = vector.load %arg10[%c0_96, %c0_97] : memref<80x32xf32, #tpu.memory_space<vmem>>, vector<80x32xf32>
    %cst_98 = arith.constant dense<0.000000e+00> : vector<8x32xf32>
    %88 = tpu.matmul %78, %87, %cst_98 {dimension_numbers = #tpu.dot_dimension_numbers<[1], [0], [0], [1], [0, 0, 1, 1], [], []>} : vector<8x80xf32>, vector<80x32xf32>, vector<8x32xf32> -> vector<8x32xf32>
    %c0_99 = arith.constant 0 : index
    %c0_100 = arith.constant 0 : index
    %89 = vector.load %arg12[%c0_99, %c0_100] : memref<1x32xf32, #tpu.memory_space<vmem>>, vector<1x32xf32>
    %90 = vector.broadcast %89 : vector<1x32xf32> to vector<8x32xf32>
    %91 = arith.addf %88, %90 : vector<8x32xf32>
    %cst_101 = arith.constant 0.000000e+00 : f32
    %92 = vector.broadcast %cst_101 : f32 to vector<8x32xf32>
    %93 = arith.cmpf ogt, %91, %92 : vector<8x32xf32>
    %cst_102 = arith.constant 2.000000e-01 : f32
    %94 = vector.broadcast %cst_102 : f32 to vector<8x32xf32>
    %95 = arith.mulf %94, %91 : vector<8x32xf32>
    %96 = arith.select %93, %91, %95 : vector<8x32xi1>, vector<8x32xf32>
    %cst_103 = arith.constant 0.000000e+00 : f32
    %97 = vector.broadcast %cst_103 : f32 to vector<2x8x32xf32>
    %c0_104 = arith.constant 0 : index
    %c0_105 = arith.constant 0 : index
    %c0_106 = arith.constant 0 : index
    %98 = vector.load %arg34[%c0_104, %c0_105, %c0_106] : memref<5x8x32xf32, #tpu.memory_space<vmem>>, vector<2x8x32xf32>
    tpu.vector_store %arg34[%c0_104, %c0_105, %c0_106], %97 {strides = array<i32>} : memref<5x8x32xf32, #tpu.memory_space<vmem>>, vector<2x8x32xf32>,
    %c3_107 = arith.constant 3 : index
    %c0_108 = arith.constant 0 : index
    %c0_109 = arith.constant 0 : index
    %99 = vector.load %arg34[%c3_107, %c0_108, %c0_109] : memref<5x8x32xf32, #tpu.memory_space<vmem>>, vector<2x8x32xf32>
    tpu.vector_store %arg34[%c3_107, %c0_108, %c0_109], %97 {strides = array<i32>} : memref<5x8x32xf32, #tpu.memory_space<vmem>>, vector<2x8x32xf32>,
    %100 = vector.shape_cast %96 : vector<8x32xf32> to vector<1x8x32xf32>
    %c2_110 = arith.constant 2 : index
    %c0_111 = arith.constant 0 : index
    %c0_112 = arith.constant 0 : index
    %101 = vector.load %arg34[%c2_110, %c0_111, %c0_112] : memref<5x8x32xf32, #tpu.memory_space<vmem>>, vector<1x8x32xf32>
    tpu.vector_store %arg34[%c2_110, %c0_111, %c0_112], %100 {strides = array<i32>} : memref<5x8x32xf32, #tpu.memory_space<vmem>>, vector<1x8x32xf32>,
    %c0_113 = arith.constant 0 : index
    %c0_114 = arith.constant 0 : index
    %c0_115 = arith.constant 0 : index
    %102 = vector.load %arg34[%c0_113, %c0_114, %c0_115] : memref<5x8x32xf32, #tpu.memory_space<vmem>>, vector<1x8x32xf32>
    %103 = vector.shape_cast %102 : vector<1x8x32xf32> to vector<8x32xf32>
    %c1_116 = arith.constant 1 : index
    %c0_117 = arith.constant 0 : index
    %c0_118 = arith.constant 0 : index
    %104 = vector.load %arg34[%c1_116, %c0_117, %c0_118] : memref<5x8x32xf32, #tpu.memory_space<vmem>>, vector<1x8x32xf32>
    %105 = vector.shape_cast %104 : vector<1x8x32xf32> to vector<8x32xf32>
    %c2_119 = arith.constant 2 : index
    %c0_120 = arith.constant 0 : index
    %c0_121 = arith.constant 0 : index
    %106 = vector.load %arg34[%c2_119, %c0_120, %c0_121] : memref<5x8x32xf32, #tpu.memory_space<vmem>>, vector<1x8x32xf32>
    %107 = vector.shape_cast %106 : vector<1x8x32xf32> to vector<8x32xf32>
    %c3_122 = arith.constant 3 : index
    %c0_123 = arith.constant 0 : index
    %c0_124 = arith.constant 0 : index
    %108 = vector.load %arg34[%c3_122, %c0_123, %c0_124] : memref<5x8x32xf32, #tpu.memory_space<vmem>>, vector<1x8x32xf32>
    %109 = vector.shape_cast %108 : vector<1x8x32xf32> to vector<8x32xf32>
    %c4_125 = arith.constant 4 : index
    %c0_126 = arith.constant 0 : index
    %c0_127 = arith.constant 0 : index
    %110 = vector.load %arg34[%c4_125, %c0_126, %c0_127] : memref<5x8x32xf32, #tpu.memory_space<vmem>>, vector<1x8x32xf32>
    %111 = vector.shape_cast %110 : vector<1x8x32xf32> to vector<8x32xf32>
    %112 = tpu.concatenate %103, %105, %107, %109, %111 in 1 : vector<8x32xf32>, vector<8x32xf32>, vector<8x32xf32>, vector<8x32xf32>, vector<8x32xf32> -> vector<8x160xf32>
    %c0_128 = arith.constant 0 : index
    %c0_129 = arith.constant 0 : index
    %113 = vector.load %arg15[%c0_128, %c0_129] : memref<32x160xf32, #tpu.memory_space<vmem>>, vector<32x160xf32>
    %cst_130 = arith.constant dense<0.000000e+00> : vector<32x8xf32>
    %114 = tpu.matmul %113, %112, %cst_130 {dimension_numbers = #tpu.dot_dimension_numbers<[1], [1], [0], [0], [0, 0, 1, 0], [], []>} : vector<32x160xf32>, vector<8x160xf32>, vector<32x8xf32> -> vector<32x8xf32>
    %c0_131 = arith.constant 0 : index
    %c0_132 = arith.constant 0 : index
    %115 = vector.load %arg17[%c0_131, %c0_132] : memref<32x1xf32, #tpu.memory_space<vmem>>, vector<32x1xf32>
    %116 = vector.broadcast %115 : vector<32x1xf32> to vector<32x8xf32>
    %117 = arith.addf %114, %116 : vector<32x8xf32>
    %c0_133 = arith.constant 0 : index
    %c0_134 = arith.constant 0 : index
    %c0_135 = arith.constant 0 : index
    %118 = vector.load %arg29[%c0_133, %c0_134, %c0_135] : memref<1x32x8xf32, #tpu.memory_space<vmem>>, vector<1x32x8xf32>
    %119 = vector.shape_cast %118 : vector<1x32x8xf32> to vector<32x8xf32>
    %120 = vector.shape_cast %117 : vector<32x8xf32> to vector<1x32x8xf32>
    tpu.vector_store %arg29[%c0_133, %c0_134, %c0_135], %120 {strides = array<i32>} : memref<1x32x8xf32, #tpu.memory_space<vmem>>, vector<1x32x8xf32>,
    %c0_136 = arith.constant 0 : index
    %c0_137 = arith.constant 0 : index
    %121 = vector.load %arg14[%c0_136, %c0_137] : memref<160x32xf32, #tpu.memory_space<vmem>>, vector<160x32xf32>
    %cst_138 = arith.constant dense<0.000000e+00> : vector<8x32xf32>
    %122 = tpu.matmul %112, %121, %cst_138 {dimension_numbers = #tpu.dot_dimension_numbers<[1], [0], [0], [1], [0, 0, 1, 1], [], []>} : vector<8x160xf32>, vector<160x32xf32>, vector<8x32xf32> -> vector<8x32xf32>
    %c0_139 = arith.constant 0 : index
    %c0_140 = arith.constant 0 : index
    %123 = vector.load %arg16[%c0_139, %c0_140] : memref<1x32xf32, #tpu.memory_space<vmem>>, vector<1x32xf32>
    %124 = vector.broadcast %123 : vector<1x32xf32> to vector<8x32xf32>
    %125 = arith.addf %122, %124 : vector<8x32xf32>
    %cst_141 = arith.constant 0.000000e+00 : f32
    %126 = vector.broadcast %cst_141 : f32 to vector<8x32xf32>
    %127 = arith.cmpf ogt, %125, %126 : vector<8x32xf32>
    %cst_142 = arith.constant 2.000000e-01 : f32
    %128 = vector.broadcast %cst_142 : f32 to vector<8x32xf32>
    %129 = arith.mulf %128, %125 : vector<8x32xf32>
    %130 = arith.select %127, %125, %129 : vector<8x32xi1>, vector<8x32xf32>
    %cst_143 = arith.constant 0.000000e+00 : f32
    %131 = vector.broadcast %cst_143 : f32 to vector<2x8x32xf32>
    %c0_144 = arith.constant 0 : index
    %c0_145 = arith.constant 0 : index
    %c0_146 = arith.constant 0 : index
    %132 = vector.load %arg35[%c0_144, %c0_145, %c0_146] : memref<5x8x32xf32, #tpu.memory_space<vmem>>, vector<2x8x32xf32>
    tpu.vector_store %arg35[%c0_144, %c0_145, %c0_146], %131 {strides = array<i32>} : memref<5x8x32xf32, #tpu.memory_space<vmem>>, vector<2x8x32xf32>,
    %c3_147 = arith.constant 3 : index
    %c0_148 = arith.constant 0 : index
    %c0_149 = arith.constant 0 : index
    %133 = vector.load %arg35[%c3_147, %c0_148, %c0_149] : memref<5x8x32xf32, #tpu.memory_space<vmem>>, vector<2x8x32xf32>
    tpu.vector_store %arg35[%c3_147, %c0_148, %c0_149], %131 {strides = array<i32>} : memref<5x8x32xf32, #tpu.memory_space<vmem>>, vector<2x8x32xf32>,
    %134 = vector.shape_cast %130 : vector<8x32xf32> to vector<1x8x32xf32>
    %c2_150 = arith.constant 2 : index
    %c0_151 = arith.constant 0 : index
    %c0_152 = arith.constant 0 : index
    %135 = vector.load %arg35[%c2_150, %c0_151, %c0_152] : memref<5x8x32xf32, #tpu.memory_space<vmem>>, vector<1x8x32xf32>
    tpu.vector_store %arg35[%c2_150, %c0_151, %c0_152], %134 {strides = array<i32>} : memref<5x8x32xf32, #tpu.memory_space<vmem>>, vector<1x8x32xf32>,
    %c0_153 = arith.constant 0 : index
    %c0_154 = arith.constant 0 : index
    %c0_155 = arith.constant 0 : index
    %136 = vector.load %arg35[%c0_153, %c0_154, %c0_155] : memref<5x8x32xf32, #tpu.memory_space<vmem>>, vector<1x8x32xf32>
    %137 = vector.shape_cast %136 : vector<1x8x32xf32> to vector<8x32xf32>
    %c1_156 = arith.constant 1 : index
    %c0_157 = arith.constant 0 : index
    %c0_158 = arith.constant 0 : index
    %138 = vector.load %arg35[%c1_156, %c0_157, %c0_158] : memref<5x8x32xf32, #tpu.memory_space<vmem>>, vector<1x8x32xf32>
    %139 = vector.shape_cast %138 : vector<1x8x32xf32> to vector<8x32xf32>
    %c2_159 = arith.constant 2 : index
    %c0_160 = arith.constant 0 : index
    %c0_161 = arith.constant 0 : index
    %140 = vector.load %arg35[%c2_159, %c0_160, %c0_161] : memref<5x8x32xf32, #tpu.memory_space<vmem>>, vector<1x8x32xf32>
    %141 = vector.shape_cast %140 : vector<1x8x32xf32> to vector<8x32xf32>
    %c3_162 = arith.constant 3 : index
    %c0_163 = arith.constant 0 : index
    %c0_164 = arith.constant 0 : index
    %142 = vector.load %arg35[%c3_162, %c0_163, %c0_164] : memref<5x8x32xf32, #tpu.memory_space<vmem>>, vector<1x8x32xf32>
    %143 = vector.shape_cast %142 : vector<1x8x32xf32> to vector<8x32xf32>
    %c4_165 = arith.constant 4 : index
    %c0_166 = arith.constant 0 : index
    %c0_167 = arith.constant 0 : index
    %144 = vector.load %arg35[%c4_165, %c0_166, %c0_167] : memref<5x8x32xf32, #tpu.memory_space<vmem>>, vector<1x8x32xf32>
    %145 = vector.shape_cast %144 : vector<1x8x32xf32> to vector<8x32xf32>
    %146 = tpu.concatenate %137, %139, %141, %143, %145 in 1 : vector<8x32xf32>, vector<8x32xf32>, vector<8x32xf32>, vector<8x32xf32>, vector<8x32xf32> -> vector<8x160xf32>
    %c0_168 = arith.constant 0 : index
    %c0_169 = arith.constant 0 : index
    %147 = vector.load %arg19[%c0_168, %c0_169] : memref<32x160xf32, #tpu.memory_space<vmem>>, vector<32x160xf32>
    %cst_170 = arith.constant dense<0.000000e+00> : vector<32x8xf32>
    %148 = tpu.matmul %147, %146, %cst_170 {dimension_numbers = #tpu.dot_dimension_numbers<[1], [1], [0], [0], [0, 0, 1, 0], [], []>} : vector<32x160xf32>, vector<8x160xf32>, vector<32x8xf32> -> vector<32x8xf32>
    %c0_171 = arith.constant 0 : index
    %c0_172 = arith.constant 0 : index
    %149 = vector.load %arg21[%c0_171, %c0_172] : memref<32x1xf32, #tpu.memory_space<vmem>>, vector<32x1xf32>
    %150 = vector.broadcast %149 : vector<32x1xf32> to vector<32x8xf32>
    %151 = arith.addf %148, %150 : vector<32x8xf32>
    %c0_173 = arith.constant 0 : index
    %c0_174 = arith.constant 0 : index
    %c0_175 = arith.constant 0 : index
    %152 = vector.load %arg30[%c0_173, %c0_174, %c0_175] : memref<1x32x8xf32, #tpu.memory_space<vmem>>, vector<1x32x8xf32>
    %153 = vector.shape_cast %152 : vector<1x32x8xf32> to vector<32x8xf32>
    %154 = vector.shape_cast %151 : vector<32x8xf32> to vector<1x32x8xf32>
    tpu.vector_store %arg30[%c0_173, %c0_174, %c0_175], %154 {strides = array<i32>} : memref<1x32x8xf32, #tpu.memory_space<vmem>>, vector<1x32x8xf32>,
    %c0_176 = arith.constant 0 : index
    %c0_177 = arith.constant 0 : index
    %155 = vector.load %arg18[%c0_176, %c0_177] : memref<160x32xf32, #tpu.memory_space<vmem>>, vector<160x32xf32>
    %cst_178 = arith.constant dense<0.000000e+00> : vector<8x32xf32>
    %156 = tpu.matmul %146, %155, %cst_178 {dimension_numbers = #tpu.dot_dimension_numbers<[1], [0], [0], [1], [0, 0, 1, 1], [], []>} : vector<8x160xf32>, vector<160x32xf32>, vector<8x32xf32> -> vector<8x32xf32>
    %c0_179 = arith.constant 0 : index
    %c0_180 = arith.constant 0 : index
    %157 = vector.load %arg20[%c0_179, %c0_180] : memref<1x32xf32, #tpu.memory_space<vmem>>, vector<1x32xf32>
    %158 = vector.broadcast %157 : vector<1x32xf32> to vector<8x32xf32>
    %159 = arith.addf %156, %158 : vector<8x32xf32>
    %cst_181 = arith.constant 0.000000e+00 : f32
    %160 = vector.broadcast %cst_181 : f32 to vector<8x32xf32>
    %161 = arith.cmpf ogt, %159, %160 : vector<8x32xf32>
    %cst_182 = arith.constant 2.000000e-01 : f32
    %162 = vector.broadcast %cst_182 : f32 to vector<8x32xf32>
    %163 = arith.mulf %162, %159 : vector<8x32xf32>
    %164 = arith.select %161, %159, %163 : vector<8x32xi1>, vector<8x32xf32>
    %cst_183 = arith.constant 0.000000e+00 : f32
    %165 = vector.broadcast %cst_183 : f32 to vector<1x8x32xf32>
    %c0_184 = arith.constant 0 : index
    %c0_185 = arith.constant 0 : index
    %c0_186 = arith.constant 0 : index
    %166 = vector.load %arg36[%c0_184, %c0_185, %c0_186] : memref<3x8x32xf32, #tpu.memory_space<vmem>>, vector<1x8x32xf32>
    tpu.vector_store %arg36[%c0_184, %c0_185, %c0_186], %165 {strides = array<i32>} : memref<3x8x32xf32, #tpu.memory_space<vmem>>, vector<1x8x32xf32>,
    %c2_187 = arith.constant 2 : index
    %c0_188 = arith.constant 0 : index
    %c0_189 = arith.constant 0 : index
    %167 = vector.load %arg36[%c2_187, %c0_188, %c0_189] : memref<3x8x32xf32, #tpu.memory_space<vmem>>, vector<1x8x32xf32>
    tpu.vector_store %arg36[%c2_187, %c0_188, %c0_189], %165 {strides = array<i32>} : memref<3x8x32xf32, #tpu.memory_space<vmem>>, vector<1x8x32xf32>,
    %168 = vector.shape_cast %164 : vector<8x32xf32> to vector<1x8x32xf32>
    %c1_190 = arith.constant 1 : index
    %c0_191 = arith.constant 0 : index
    %c0_192 = arith.constant 0 : index
    %169 = vector.load %arg36[%c1_190, %c0_191, %c0_192] : memref<3x8x32xf32, #tpu.memory_space<vmem>>, vector<1x8x32xf32>
    tpu.vector_store %arg36[%c1_190, %c0_191, %c0_192], %168 {strides = array<i32>} : memref<3x8x32xf32, #tpu.memory_space<vmem>>, vector<1x8x32xf32>,
    %c0_193 = arith.constant 0 : index
    %c0_194 = arith.constant 0 : index
    %c0_195 = arith.constant 0 : index
    %170 = vector.load %arg36[%c0_193, %c0_194, %c0_195] : memref<3x8x32xf32, #tpu.memory_space<vmem>>, vector<1x8x32xf32>
    %171 = vector.shape_cast %170 : vector<1x8x32xf32> to vector<8x32xf32>
    %c1_196 = arith.constant 1 : index
    %c0_197 = arith.constant 0 : index
    %c0_198 = arith.constant 0 : index
    %172 = vector.load %arg36[%c1_196, %c0_197, %c0_198] : memref<3x8x32xf32, #tpu.memory_space<vmem>>, vector<1x8x32xf32>
    %173 = vector.shape_cast %172 : vector<1x8x32xf32> to vector<8x32xf32>
    %c2_199 = arith.constant 2 : index
    %c0_200 = arith.constant 0 : index
    %c0_201 = arith.constant 0 : index
    %174 = vector.load %arg36[%c2_199, %c0_200, %c0_201] : memref<3x8x32xf32, #tpu.memory_space<vmem>>, vector<1x8x32xf32>
    %175 = vector.shape_cast %174 : vector<1x8x32xf32> to vector<8x32xf32>
    %176 = tpu.concatenate %171, %173, %175 in 1 : vector<8x32xf32>, vector<8x32xf32>, vector<8x32xf32> -> vector<8x96xf32>
    %c0_202 = arith.constant 0 : index
    %c0_203 = arith.constant 0 : index
    %177 = vector.load %arg23[%c0_202, %c0_203] : memref<1x96xf32, #tpu.memory_space<vmem>>, vector<1x96xf32>
    %cst_204 = arith.constant dense<0.000000e+00> : vector<1x8xf32>
    %178 = tpu.matmul %177, %176, %cst_204 {dimension_numbers = #tpu.dot_dimension_numbers<[1], [1], [0], [0], [0, 0, 1, 0], [], []>} : vector<1x96xf32>, vector<8x96xf32>, vector<1x8xf32> -> vector<1x8xf32>
    %c0_205 = arith.constant 0 : index
    %c0_206 = arith.constant 0 : index
    %179 = vector.load %arg25[%c0_205, %c0_206] : memref<1x1xf32, #tpu.memory_space<vmem>>, vector<1x1xf32>
    %180 = vector.broadcast %179 : vector<1x1xf32> to vector<1x8xf32>
    %181 = arith.addf %178, %180 : vector<1x8xf32>
    %c0_207 = arith.constant 0 : index
    %c0_208 = arith.constant 0 : index
    %c0_209 = arith.constant 0 : index
    %182 = vector.load %arg31[%c0_207, %c0_208, %c0_209] : memref<1x1x8xf32, #tpu.memory_space<vmem>>, vector<1x1x8xf32>
    %183 = vector.shape_cast %182 : vector<1x1x8xf32> to vector<1x8xf32>
    %184 = vector.shape_cast %181 : vector<1x8xf32> to vector<1x1x8xf32>
    tpu.vector_store %arg31[%c0_207, %c0_208, %c0_209], %184 {strides = array<i32>} : memref<1x1x8xf32, #tpu.memory_space<vmem>>, vector<1x1x8xf32>,
    return
  }
  func.func @transform_0(%arg0: i32) -> (i32, i32, i32) {
    %c0_i32 = arith.constant 0 : i32
    %c0_i32_0 = arith.constant 0 : i32
    %c0_i32_1 = arith.constant 0 : i32
    return %c0_i32, %arg0, %c0_i32_0 : i32, i32, i32
  }
  func.func @transform_1(%arg0: i32) -> (i32, i32) {
    %c0_i32 = arith.constant 0 : i32
    %c0_i32_0 = arith.constant 0 : i32
    %c0_i32_1 = arith.constant 0 : i32
    return %c0_i32, %c0_i32_0 : i32, i32
  }
  func.func @transform_2(%arg0: i32) -> (i32, i32) {
    %c0_i32 = arith.constant 0 : i32
    %c0_i32_0 = arith.constant 0 : i32
    %c0_i32_1 = arith.constant 0 : i32
    return %c0_i32, %c0_i32_0 : i32, i32
  }
  func.func @transform_3(%arg0: i32) -> (i32, i32) {
    %c0_i32 = arith.constant 0 : i32
    %c0_i32_0 = arith.constant 0 : i32
    %c0_i32_1 = arith.constant 0 : i32
    return %c0_i32, %c0_i32_0 : i32, i32
  }
  func.func @transform_4(%arg0: i32) -> (i32, i32) {
    %c0_i32 = arith.constant 0 : i32
    %c0_i32_0 = arith.constant 0 : i32
    %c0_i32_1 = arith.constant 0 : i32
    return %c0_i32, %c0_i32_0 : i32, i32
  }
  func.func @transform_5(%arg0: i32) -> (i32, i32) {
    %c0_i32 = arith.constant 0 : i32
    %c0_i32_0 = arith.constant 0 : i32
    %c0_i32_1 = arith.constant 0 : i32
    return %c0_i32, %c0_i32_0 : i32, i32
  }
  func.func @transform_6(%arg0: i32) -> (i32, i32) {
    %c0_i32 = arith.constant 0 : i32
    %c0_i32_0 = arith.constant 0 : i32
    %c0_i32_1 = arith.constant 0 : i32
    return %c0_i32, %c0_i32_0 : i32, i32
  }
  func.func @transform_7(%arg0: i32) -> (i32, i32) {
    %c0_i32 = arith.constant 0 : i32
    %c0_i32_0 = arith.constant 0 : i32
    %c0_i32_1 = arith.constant 0 : i32
    return %c0_i32, %c0_i32_0 : i32, i32
  }
  func.func @transform_8(%arg0: i32) -> (i32, i32) {
    %c0_i32 = arith.constant 0 : i32
    %c0_i32_0 = arith.constant 0 : i32
    %c0_i32_1 = arith.constant 0 : i32
    return %c0_i32, %c0_i32_0 : i32, i32
  }
  func.func @transform_9(%arg0: i32) -> (i32, i32) {
    %c0_i32 = arith.constant 0 : i32
    %c0_i32_0 = arith.constant 0 : i32
    %c0_i32_1 = arith.constant 0 : i32
    return %c0_i32, %c0_i32_0 : i32, i32
  }
  func.func @transform_10(%arg0: i32) -> (i32, i32) {
    %c0_i32 = arith.constant 0 : i32
    %c0_i32_0 = arith.constant 0 : i32
    %c0_i32_1 = arith.constant 0 : i32
    return %c0_i32, %c0_i32_0 : i32, i32
  }
  func.func @transform_11(%arg0: i32) -> (i32, i32) {
    %c0_i32 = arith.constant 0 : i32
    %c0_i32_0 = arith.constant 0 : i32
    %c0_i32_1 = arith.constant 0 : i32
    return %c0_i32, %c0_i32_0 : i32, i32
  }
  func.func @transform_12(%arg0: i32) -> (i32, i32) {
    %c0_i32 = arith.constant 0 : i32
    %c0_i32_0 = arith.constant 0 : i32
    %c0_i32_1 = arith.constant 0 : i32
    return %c0_i32, %c0_i32_0 : i32, i32
  }
  func.func @transform_13(%arg0: i32) -> (i32, i32) {
    %c0_i32 = arith.constant 0 : i32
    %c0_i32_0 = arith.constant 0 : i32
    %c0_i32_1 = arith.constant 0 : i32
    return %c0_i32, %c0_i32_0 : i32, i32
  }
  func.func @transform_14(%arg0: i32) -> (i32, i32) {
    %c0_i32 = arith.constant 0 : i32
    %c0_i32_0 = arith.constant 0 : i32
    %c0_i32_1 = arith.constant 0 : i32
    return %c0_i32, %c0_i32_0 : i32, i32
  }
  func.func @transform_15(%arg0: i32) -> (i32, i32) {
    %c0_i32 = arith.constant 0 : i32
    %c0_i32_0 = arith.constant 0 : i32
    %c0_i32_1 = arith.constant 0 : i32
    return %c0_i32, %c0_i32_0 : i32, i32
  }
  func.func @transform_16(%arg0: i32) -> (i32, i32) {
    %c0_i32 = arith.constant 0 : i32
    %c0_i32_0 = arith.constant 0 : i32
    %c0_i32_1 = arith.constant 0 : i32
    return %c0_i32, %c0_i32_0 : i32, i32
  }
  func.func @transform_17(%arg0: i32) -> (i32, i32) {
    %c0_i32 = arith.constant 0 : i32
    %c0_i32_0 = arith.constant 0 : i32
    %c0_i32_1 = arith.constant 0 : i32
    return %c0_i32, %c0_i32_0 : i32, i32
  }
  func.func @transform_18(%arg0: i32) -> (i32, i32) {
    %c0_i32 = arith.constant 0 : i32
    %c0_i32_0 = arith.constant 0 : i32
    %c0_i32_1 = arith.constant 0 : i32
    return %c0_i32, %c0_i32_0 : i32, i32
  }
  func.func @transform_19(%arg0: i32) -> (i32, i32) {
    %c0_i32 = arith.constant 0 : i32
    %c0_i32_0 = arith.constant 0 : i32
    %c0_i32_1 = arith.constant 0 : i32
    return %c0_i32, %c0_i32_0 : i32, i32
  }
  func.func @transform_20(%arg0: i32) -> (i32, i32) {
    %c0_i32 = arith.constant 0 : i32
    %c0_i32_0 = arith.constant 0 : i32
    %c0_i32_1 = arith.constant 0 : i32
    return %c0_i32, %c0_i32_0 : i32, i32
  }
  func.func @transform_21(%arg0: i32) -> (i32, i32) {
    %c0_i32 = arith.constant 0 : i32
    %c0_i32_0 = arith.constant 0 : i32
    %c0_i32_1 = arith.constant 0 : i32
    return %c0_i32, %c0_i32_0 : i32, i32
  }
  func.func @transform_22(%arg0: i32) -> (i32, i32) {
    %c0_i32 = arith.constant 0 : i32
    %c0_i32_0 = arith.constant 0 : i32
    %c0_i32_1 = arith.constant 0 : i32
    return %c0_i32, %c0_i32_0 : i32, i32
  }
  func.func @transform_23(%arg0: i32) -> (i32, i32) {
    %c0_i32 = arith.constant 0 : i32
    %c0_i32_0 = arith.constant 0 : i32
    %c0_i32_1 = arith.constant 0 : i32
    return %c0_i32, %c0_i32_0 : i32, i32
  }
  func.func @transform_24(%arg0: i32) -> (i32, i32) {
    %c0_i32 = arith.constant 0 : i32
    %c0_i32_0 = arith.constant 0 : i32
    %c0_i32_1 = arith.constant 0 : i32
    return %c0_i32, %c0_i32_0 : i32, i32
  }
  func.func @transform_25(%arg0: i32) -> (i32, i32, i32) {
    %c0_i32 = arith.constant 0 : i32
    %c0_i32_0 = arith.constant 0 : i32
    %c0_i32_1 = arith.constant 0 : i32
    return %arg0, %c0_i32, %c0_i32_0 : i32, i32, i32
  }
  func.func @transform_26(%arg0: i32) -> (i32, i32, i32) {
    %c0_i32 = arith.constant 0 : i32
    %c0_i32_0 = arith.constant 0 : i32
    %c0_i32_1 = arith.constant 0 : i32
    return %arg0, %c0_i32, %c0_i32_0 : i32, i32, i32
  }
  func.func @transform_27(%arg0: i32) -> (i32, i32, i32) {
    %c0_i32 = arith.constant 0 : i32
    %c0_i32_0 = arith.constant 0 : i32
    %c0_i32_1 = arith.constant 0 : i32
    return %arg0, %c0_i32, %c0_i32_0 : i32, i32, i32
  }
  func.func @transform_28(%arg0: i32) -> (i32, i32, i32) {
    %c0_i32 = arith.constant 0 : i32
    %c0_i32_0 = arith.constant 0 : i32
    %c0_i32_1 = arith.constant 0 : i32
    return %arg0, %c0_i32, %c0_i32_0 : i32, i32, i32
  }
  func.func @transform_29(%arg0: i32) -> (i32, i32, i32) {
    %c0_i32 = arith.constant 0 : i32
    %c0_i32_0 = arith.constant 0 : i32
    %c0_i32_1 = arith.constant 0 : i32
    return %arg0, %c0_i32, %c0_i32_0 : i32, i32, i32
  }
  func.func @transform_30(%arg0: i32) -> (i32, i32, i32) {
    %c0_i32 = arith.constant 0 : i32
    %c0_i32_0 = arith.constant 0 : i32
    %c0_i32_1 = arith.constant 0 : i32
    return %arg0, %c0_i32, %c0_i32_0 : i32, i32, i32
  }
}

</mosaic_0001>

<llo_original>
// kernel: tpu_custom_call.1
$region0: #{tpu_custom_call.1}
  #allocation0 [shape = 'u32[]', space=smem, size = 0x4, offset = 0x4, fixed_abs, tag = 'smem constant byte address 0x4 - core index']
  #allocation1 [shape = 'u32[144,128]{1,0:T(1,128)}', space=vmem, size = 0x12000, scoped, tag = 'internal scratch']
  #allocation2 [shape = 'f32[10,8,4]{2,1,0:T(8,128)}', space=vmem, size = 0xa000, scoped, tag = 'scratch operand']
  #allocation3 [shape = 'f32[6,8,16]{2,1,0:T(8,128)}', space=vmem, size = 0x6000, scoped, tag = 'scratch operand']
  #allocation4 [shape = 'f32[5,8,32]{2,1,0:T(8,128)}', space=vmem, size = 0x5000, scoped, tag = 'scratch operand']
  #allocation5 [shape = 'f32[5,8,32]{2,1,0:T(8,128)}', space=vmem, size = 0x5000, scoped, tag = 'scratch operand']
  #allocation6 [shape = 'f32[3,8,32]{2,1,0:T(8,128)}', space=vmem, size = 0x3000, scoped, tag = 'scratch operand']
  #allocation7 [shape = 'f32[1,1]{1,0:T(1,128)S(1)}', space=vmem, size = 0x200, scoped, tag = 'scoped memory for tpu_custom_call.1']
  #allocation8 [shape = 'f32[1,1]{1,0:T(1,128)S(1)}', space=vmem, size = 0x200, scoped, tag = 'scoped memory for tpu_custom_call.1']
  %s0 = inlined_call_operand.smem [shape: u32[31], index: -1, kind: input, shape index: {}]
  %s1 = sld [smem:[%s0]]
  %s2 = scalar_lea.smem %s0, 1
  %s3 = sld [smem:[%s2]]
  %s4 = scalar_lea.smem %s0, 2
  %s5 = sld [smem:[%s4]]
  %s6 = scalar_lea.smem %s0, 3
  %s7 = sld [smem:[%s6]]
  %s8 = scalar_lea.smem %s0, 4
  %s9 = sld [smem:[%s8]]
  %s10 = scalar_lea.smem %s0, 5
  %s11 = sld [smem:[%s10]]
  %s12 = scalar_lea.smem %s0, 6
  %s13 = sld [smem:[%s12]]
  %s14 = scalar_lea.smem %s0, 7
  %s15 = sld [smem:[%s14]]
  %s16 = scalar_lea.smem %s0, 8
  %s17 = sld [smem:[%s16]]
  %s18 = scalar_lea.smem %s0, 9
  %s19 = sld [smem:[%s18]]
  %s20 = scalar_lea.smem %s0, 10
  %s21 = sld [smem:[%s20]]
  %s22 = scalar_lea.smem %s0, 11
  %s23 = sld [smem:[%s22]]
  %s24 = scalar_lea.smem %s0, 12
  %s25 = sld [smem:[%s24]]
  %s26 = scalar_lea.smem %s0, 13
  %s27 = sld [smem:[%s26]]
  %s28 = scalar_lea.smem %s0, 14
  %s29 = sld [smem:[%s28]]
  %s30 = scalar_lea.smem %s0, 15
  %s31 = sld [smem:[%s30]]
  %s32 = scalar_lea.smem %s0, 16
  %s33 = sld [smem:[%s32]]
  %s34 = scalar_lea.smem %s0, 17
  %s35 = sld [smem:[%s34]]
  %s36 = scalar_lea.smem %s0, 18
  %s37 = sld [smem:[%s36]]
  %s38 = scalar_lea.smem %s0, 19
  %s39 = sld [smem:[%s38]]
  %s40 = scalar_lea.smem %s0, 20
  %s41 = sld [smem:[%s40]]
  %s42 = scalar_lea.smem %s0, 21
  %s43 = sld [smem:[%s42]]
  %s44 = scalar_lea.smem %s0, 22
  %s45 = sld [smem:[%s44]]
  %s46 = scalar_lea.smem %s0, 23
  %s47 = sld [smem:[%s46]]
  %s48 = scalar_lea.smem %s0, 24
  %s49 = sld [smem:[%s48]]
  %s50 = scalar_lea.smem %s0, 25
  %s51 = sld [smem:[%s50]]
  %s52 = scalar_lea.smem %s0, 26
  %s53 = sld [smem:[%s52]]
  %s54 = scalar_lea.smem %s0, 27
  %s55 = sld [smem:[%s54]]
  %s56 = scalar_lea.smem %s0, 28
  %s57 = sld [smem:[%s56]]
  %s58 = scalar_lea.smem %s0, 29
  %s59 = sld [smem:[%s58]]
  %s60 = scalar_lea.smem %s0, 30
  %s61 = sld [smem:[%s60]]
  %62 = xla_tuple %s51, %s53, %s55, %s57, %s59, %s61
  %s63 = sld [smem:[#allocation0]]
  $region150: #{tpu_custom_call.1} parent=0
    _
  %s65 = ssub.s32 1, %s63
  %s66 = scalar_select 0, %s65, %s63
  %v67 = vstv %s47
  %68 = vst [vmem:[#allocation7] sm:$0x1] %v67
  %v69 = vstv %s49
  %70 = vst [vmem:[#allocation8] sm:$0x1] %v69
  $region1: #{tpu_custom_call.1} parent=0
    #allocation9 [shape = 'u8[2048]{0}', space=vmem, size = 0x800, scoped, tag = 'output window, operand 0, single buffered']
    #allocation10 [shape = 's32[1]{0}', space=sflag, size = 0x4, scoped, tag = 'scoped memory for tpu_custom_call.1']
    #allocation11 [shape = 'u8[8192]{0}', space=vmem, size = 0x2000, scoped, tag = 'output window, operand 1, single buffered']
    #allocation12 [shape = 's32[1]{0}', space=sflag, size = 0x4, scoped, tag = 'scoped memory for tpu_custom_call.1']
    #allocation13 [shape = 'u8[512]{0}', space=vmem, size = 0x400, scoped, tag = 'output window, operand 5, single buffered']
    %71 = vsyncpa [#allocation10], 0
    %72 = vsyncpa [#allocation12], 0
    // Predicated region
    $region2: #{tpu_custom_call.1} parent=1 // pred_check
      _
    $region3: #{tpu_custom_call.1} parent=1 // pred_check_branch
      %74 = sbr.rel (0) target = $region5
    $region4: #{tpu_custom_call.1} parent=1 // pred_region
      _
    $region5: #{tpu_custom_call.1} parent=1 // pred_fallthru
      _
    // Predicated region
    $region6: #{tpu_custom_call.1} parent=1 // pred_check
      _
    $region7: #{tpu_custom_call.1} parent=1 // pred_check_branch
      %76 = sbr.rel (0) target = $region9
    $region8: #{tpu_custom_call.1} parent=1 // pred_region
      _
    $region9: #{tpu_custom_call.1} parent=1 // pred_fallthru
      _
    // Predicated region
    $region10: #{tpu_custom_call.1} parent=1 // pred_check
      _
    $region11: #{tpu_custom_call.1} parent=1 // pred_check_branch
      %78 = sbr.rel (0) target = $region13
    $region12: #{tpu_custom_call.1} parent=1 // pred_region
      _
    $region13: #{tpu_custom_call.1} parent=1 // pred_fallthru
      _
    // Predicated region
    $region14: #{tpu_custom_call.1} parent=1 // pred_check
      _
    $region15: #{tpu_custom_call.1} parent=1 // pred_check_branch
      %80 = sbr.rel (0) target = $region17
    $region16: #{tpu_custom_call.1} parent=1 // pred_region
      _
    $region17: #{tpu_custom_call.1} parent=1 // pred_fallthru
      _
    // Predicated region
    $region18: #{tpu_custom_call.1} parent=1 // pred_check
      _
    $region19: #{tpu_custom_call.1} parent=1 // pred_check_branch
      %82 = sbr.rel (0) target = $region21
    $region20: #{tpu_custom_call.1} parent=1 // pred_region
      _
    $region21: #{tpu_custom_call.1} parent=1 // pred_fallthru
      _
    // Predicated region
    $region22: #{tpu_custom_call.1} parent=1 // pred_check
      _
    $region23: #{tpu_custom_call.1} parent=1 // pred_check_branch
      %84 = sbr.rel (0) target = $region25
    $region24: #{tpu_custom_call.1} parent=1 // pred_region
      _
    $region25: #{tpu_custom_call.1} parent=1 // pred_fallthru
      _
    // Predicated region
    $region26: #{tpu_custom_call.1} parent=1 // pred_check
      _
    $region27: #{tpu_custom_call.1} parent=1 // pred_check_branch
      %86 = sbr.rel (0) target = $region29
    $region28: #{tpu_custom_call.1} parent=1 // pred_region
      _
    $region29: #{tpu_custom_call.1} parent=1 // pred_fallthru
      _
    // Predicated region
    $region30: #{tpu_custom_call.1} parent=1 // pred_check
      _
    $region31: #{tpu_custom_call.1} parent=1 // pred_check_branch
      %88 = sbr.rel (0) target = $region33
    $region32: #{tpu_custom_call.1} parent=1 // pred_region
      _
    $region33: #{tpu_custom_call.1} parent=1 // pred_fallthru
      _
    // Predicated region
    $region34: #{tpu_custom_call.1} parent=1 // pred_check
      _
    $region35: #{tpu_custom_call.1} parent=1 // pred_check_branch
      %90 = sbr.rel (0) target = $region37
    $region36: #{tpu_custom_call.1} parent=1 // pred_region
      _
    $region37: #{tpu_custom_call.1} parent=1 // pred_fallthru
      _
    // Predicated region
    $region38: #{tpu_custom_call.1} parent=1 // pred_check
      _
    $region39: #{tpu_custom_call.1} parent=1 // pred_check_branch
      %92 = sbr.rel (0) target = $region41
    $region40: #{tpu_custom_call.1} parent=1 // pred_region
      _
    $region41: #{tpu_custom_call.1} parent=1 // pred_fallthru
      _
    // Predicated region
    $region42: #{tpu_custom_call.1} parent=1 // pred_check
      _
    $region43: #{tpu_custom_call.1} parent=1 // pred_check_branch
      %94 = sbr.rel (0) target = $region45
    $region44: #{tpu_custom_call.1} parent=1 // pred_region
      _
    $region45: #{tpu_custom_call.1} parent=1 // pred_fallthru
      _
    // Predicated region
    $region46: #{tpu_custom_call.1} parent=1 // pred_check
      _
    $region47: #{tpu_custom_call.1} parent=1 // pred_check_branch
      %96 = sbr.rel (0) target = $region49
    $region48: #{tpu_custom_call.1} parent=1 // pred_region
      _
    $region49: #{tpu_custom_call.1} parent=1 // pred_fallthru
      _
    // Predicated region
    $region50: #{tpu_custom_call.1} parent=1 // pred_check
      _
    $region51: #{tpu_custom_call.1} parent=1 // pred_check_branch
      %98 = sbr.rel (0) target = $region53
    $region52: #{tpu_custom_call.1} parent=1 // pred_region
      _
    $region53: #{tpu_custom_call.1} parent=1 // pred_fallthru
      _
    // Predicated region
    $region54: #{tpu_custom_call.1} parent=1 // pred_check
      _
    $region55: #{tpu_custom_call.1} parent=1 // pred_check_branch
      %100 = sbr.rel (0) target = $region57
    $region56: #{tpu_custom_call.1} parent=1 // pred_region
      _
    $region57: #{tpu_custom_call.1} parent=1 // pred_fallthru
      _
    // Predicated region
    $region58: #{tpu_custom_call.1} parent=1 // pred_check
      _
    $region59: #{tpu_custom_call.1} parent=1 // pred_check_branch
      %102 = sbr.rel (0) target = $region61
    $region60: #{tpu_custom_call.1} parent=1 // pred_region
      _
    $region61: #{tpu_custom_call.1} parent=1 // pred_fallthru
      _
    // Predicated region
    $region62: #{tpu_custom_call.1} parent=1 // pred_check
      _
    $region63: #{tpu_custom_call.1} parent=1 // pred_check_branch
      %104 = sbr.rel (0) target = $region65
    $region64: #{tpu_custom_call.1} parent=1 // pred_region
      _
    $region65: #{tpu_custom_call.1} parent=1 // pred_fallthru
      _
    // Predicated region
    $region66: #{tpu_custom_call.1} parent=1 // pred_check
      _
    $region67: #{tpu_custom_call.1} parent=1 // pred_check_branch
      %106 = sbr.rel (0) target = $region69
    $region68: #{tpu_custom_call.1} parent=1 // pred_region
      _
    $region69: #{tpu_custom_call.1} parent=1 // pred_fallthru
      _
    // Predicated region
    $region70: #{tpu_custom_call.1} parent=1 // pred_check
      _
    $region71: #{tpu_custom_call.1} parent=1 // pred_check_branch
      %108 = sbr.rel (0) target = $region73
    $region72: #{tpu_custom_call.1} parent=1 // pred_region
      _
    $region73: #{tpu_custom_call.1} parent=1 // pred_fallthru
      _
    // Predicated region
    $region74: #{tpu_custom_call.1} parent=1 // pred_check
      _
    $region75: #{tpu_custom_call.1} parent=1 // pred_check_branch
      %110 = sbr.rel (0) target = $region77
    $region76: #{tpu_custom_call.1} parent=1 // pred_region
      _
    $region77: #{tpu_custom_call.1} parent=1 // pred_fallthru
      _
    // Predicated region
    $region78: #{tpu_custom_call.1} parent=1 // pred_check
      _
    $region79: #{tpu_custom_call.1} parent=1 // pred_check_branch
      %112 = sbr.rel (0) target = $region81
    $region80: #{tpu_custom_call.1} parent=1 // pred_region
      _
    $region81: #{tpu_custom_call.1} parent=1 // pred_fallthru
      _
    // Predicated region
    $region82: #{tpu_custom_call.1} parent=1 // pred_check
      _
    $region83: #{tpu_custom_call.1} parent=1 // pred_check_branch
      %114 = sbr.rel (0) target = $region85
    $region84: #{tpu_custom_call.1} parent=1 // pred_region
      _
    $region85: #{tpu_custom_call.1} parent=1 // pred_fallthru
      _
    // Predicated region
    $region86: #{tpu_custom_call.1} parent=1 // pred_check
      _
    $region87: #{tpu_custom_call.1} parent=1 // pred_check_branch
      %116 = sbr.rel (0) target = $region89
    $region88: #{tpu_custom_call.1} parent=1 // pred_region
      _
    $region89: #{tpu_custom_call.1} parent=1 // pred_fallthru
      _
    // Predicated region
    $region90: #{tpu_custom_call.1} parent=1 // pred_check
      _
    $region91: #{tpu_custom_call.1} parent=1 // pred_check_branch
      %118 = sbr.rel (0) target = $region93
    $region92: #{tpu_custom_call.1} parent=1 // pred_region
      _
    $region93: #{tpu_custom_call.1} parent=1 // pred_fallthru
      _
    // Predicated region
    $region94: #{tpu_custom_call.1} parent=1 // pred_check
      _
    $region95: #{tpu_custom_call.1} parent=1 // pred_check_branch
      %120 = sbr.rel (0) target = $region97
    $region96: #{tpu_custom_call.1} parent=1 // pred_region
      _
    $region97: #{tpu_custom_call.1} parent=1 // pred_fallthru
      _
    // Predicated region
    $region98: #{tpu_custom_call.1} parent=1 // pred_check
      _
    $region99: #{tpu_custom_call.1} parent=1 // pred_check_branch
      %122 = sbr.rel (0) target = $region101
    $region100: #{tpu_custom_call.1} parent=1 // pred_region
      _
    $region101: #{tpu_custom_call.1} parent=1 // pred_fallthru
      _
    %v123 = vld [vmem:[%s1] sm:$0xff]
    %v124 = vld [vmem:[%s1 + $0x18] sm:$0xff]
    %v125 = vld [vmem:[%s1 + $0x30] sm:$0xff]
    %v126 = vld [vmem:[%s1 + $0x48] sm:$0xff]
    %v127 = vld [vmem:[%s1 + $0x60] sm:$0xff]
    %v128 = vld [vmem:[%s1 + $0x78] sm:$0xff]
    %s129 = scalar_lea.vmem %s1, 8
    %v130 = vld [vmem:[%s129] sm:$0xff]
    %v131 = vld [vmem:[%s129 + $0x18] sm:$0xff]
    %v132 = vld [vmem:[%s129 + $0x30] sm:$0xff]
    %v133 = vld [vmem:[%s129 + $0x48] sm:$0xff]
    %v134 = vld [vmem:[%s129 + $0x60] sm:$0xff]
    %v135 = vld [vmem:[%s129 + $0x78] sm:$0xff]
    %s136 = scalar_lea.vmem %s1, 16
    %v137 = vld [vmem:[%s136] sm:$0xff]
    %v138 = vld [vmem:[%s136 + $0x18] sm:$0xff]
    %v139 = vld [vmem:[%s136 + $0x30] sm:$0xff]
    %v140 = vld [vmem:[%s136 + $0x48] sm:$0xff]
    %v141 = vld [vmem:[%s136 + $0x60] sm:$0xff]
    %v142 = vld [vmem:[%s136 + $0x78] sm:$0xff]
    %s143 = scalar_lea.vmem %s1, 24
    %v144 = vld [vmem:[%s143] sm:$0xff]
    %v145 = vld [vmem:[%s143 + $0x18] sm:$0xff]
    %v146 = vld [vmem:[%s143 + $0x30] sm:$0xff]
    %v147 = vld [vmem:[%s143 + $0x48] sm:$0xff]
    %v148 = vld [vmem:[%s143 + $0x60] sm:$0xff]
    %v149 = vld [vmem:[%s143 + $0x78] sm:$0xff]
    %s150 = scalar_lea.vmem %s1, 32
    %v151 = vld [vmem:[%s150] sm:$0xff]
    %v152 = vld [vmem:[%s150 + $0x18] sm:$0xff]
    %v153 = vld [vmem:[%s150 + $0x30] sm:$0xff]
    %v154 = vld [vmem:[%s150 + $0x48] sm:$0xff]
    %v155 = vld [vmem:[%s150 + $0x60] sm:$0xff]
    %v156 = vld [vmem:[%s150 + $0x78] sm:$0xff]
    %163 = vrot.lane.b32.xlu0 %v130, 1
    %v164 = vpop.permute.xlu0 %163
    %165 = vrot.lane.b32.xlu0 %v131, 1
    %v166 = vpop.permute.xlu0 %165
    %167 = vrot.lane.b32.xlu0 %v132, 1
    %v168 = vpop.permute.xlu0 %167
    %169 = vrot.lane.b32.xlu0 %v133, 1
    %v170 = vpop.permute.xlu0 %169
    %171 = vrot.lane.b32.xlu0 %v134, 1
    %v172 = vpop.permute.xlu0 %171
    %173 = vrot.lane.b32.xlu0 %v135, 1
    %v174 = vpop.permute.xlu0 %173
    %187 = vrot.lane.b32.xlu0 %v137, 2
    %v188 = vpop.permute.xlu0 %187
    %189 = vrot.lane.b32.xlu0 %v138, 2
    %v190 = vpop.permute.xlu0 %189
    %191 = vrot.lane.b32.xlu0 %v139, 2
    %v192 = vpop.permute.xlu0 %191
    %193 = vrot.lane.b32.xlu0 %v140, 2
    %v194 = vpop.permute.xlu0 %193
    %195 = vrot.lane.b32.xlu0 %v141, 2
    %v196 = vpop.permute.xlu0 %195
    %197 = vrot.lane.b32.xlu0 %v142, 2
    %v198 = vpop.permute.xlu0 %197
    %211 = vrot.lane.b32.xlu0 %v144, 3
    %v212 = vpop.permute.xlu0 %211
    %213 = vrot.lane.b32.xlu0 %v145, 3
    %v214 = vpop.permute.xlu0 %213
    %215 = vrot.lane.b32.xlu0 %v146, 3
    %v216 = vpop.permute.xlu0 %215
    %217 = vrot.lane.b32.xlu0 %v147, 3
    %v218 = vpop.permute.xlu0 %217
    %219 = vrot.lane.b32.xlu0 %v148, 3
    %v220 = vpop.permute.xlu0 %219
    %221 = vrot.lane.b32.xlu0 %v149, 3
    %v222 = vpop.permute.xlu0 %221
    %235 = vrot.lane.b32.xlu0 %v151, 4
    %v236 = vpop.permute.xlu0 %235
    %237 = vrot.lane.b32.xlu0 %v152, 4
    %v238 = vpop.permute.xlu0 %237
    %239 = vrot.lane.b32.xlu0 %v153, 4
    %v240 = vpop.permute.xlu0 %239
    %241 = vrot.lane.b32.xlu0 %v154, 4
    %v242 = vpop.permute.xlu0 %241
    %243 = vrot.lane.b32.xlu0 %v155, 4
    %v244 = vpop.permute.xlu0 %243
    %245 = vrot.lane.b32.xlu0 %v156, 4
    %v246 = vpop.permute.xlu0 %245
    %vm253 = vcmask 7168
    %v254 = vsel %vm253, %v123, %v164
    %v255 = vsel %vm253, %v124, %v166
    %v256 = vsel %vm253, %v125, %v168
    %v257 = vsel %vm253, %v126, %v170
    %v258 = vsel %vm253, %v127, %v172
    %v259 = vsel %vm253, %v128, %v174
    %vm260 = vcmask 15360
    %v261 = vsel %vm260, %v254, %v188
    %v262 = vsel %vm260, %v255, %v190
    %v263 = vsel %vm260, %v256, %v192
    %v264 = vsel %vm260, %v257, %v194
    %v265 = vsel %vm260, %v258, %v196
    %v266 = vsel %vm260, %v259, %v198
    %vm267 = vcmask 23552
    %v268 = vsel %vm267, %v261, %v212
    %v269 = vsel %vm267, %v262, %v214
    %v270 = vsel %vm267, %v263, %v216
    %v271 = vsel %vm267, %v264, %v218
    %v272 = vsel %vm267, %v265, %v220
    %v273 = vsel %vm267, %v266, %v222
    %vm274 = vcmask 31744
    %v275 = vsel %vm274, %v268, %v236
    %v276 = vsel %vm274, %v269, %v238
    %v277 = vsel %vm274, %v270, %v240
    %v278 = vsel %vm274, %v271, %v242
    %v279 = vsel %vm274, %v272, %v244
    %v280 = vsel %vm274, %v273, %v246
    %v281 = vld [vmem:[%s5] sm:$0xf]
    %v282 = vld [vmem:[%s9] sm:$0xf]
    %284 = vset.pattern.permute.xlu0 0
    %285 = vperm.xlu0 %284, %v282
    %v286 = vpop.permute.xlu0 %285
    %vm288 = vcmask 39936
    %v290 = vsel %vm288, %v281, 0
    %v293 = vsel %vm288, %v275, 0
    %v296 = vsel %vm288, %v276, 0
    %v299 = vsel %vm288, %v277, 0
    %v302 = vsel %vm288, %v278, 0
    %v305 = vsel %vm288, %v279, 0
    %v308 = vsel %vm288, %v280, 0
    %310 = vmatprep.subr.mxu0 0.0
    %311 = vmatpush1.xpose.msra.mxu0 0.0
    %312 = vmatprep.subr.mxu0 0.0
    %313 = vmatpush1.xpose.msra.mxu0 0.0
    %314 = vmatprep.subr.mxu0 0.0
    %315 = vmatpush1.xpose.msra.mxu0 0.0
    %316 = vmatprep.subr.mxu0 0.0
    %317 = vmatpush1.xpose.msra.mxu0 0.0
    %318 = vmatprep.subr.mxu0 0.0
    %319 = vmatpush1.xpose.msra.mxu0 0.0
    %320 = vmatprep.subr.mxu0 0.0
    %321 = vmatpush1.xpose.msra.mxu0 0.0
    %322 = vmatprep.subr.mxu0 0.0
    %323 = vmatpush1.xpose.msra.mxu0 0.0
    %324 = vmatprep.subr.mxu0 0.0
    %325 = vmatpush1.xpose.msra.mxu0 0.0
    %326 = vmatprep.subr.mxu0 0.0
    %327 = vmatpush1.xpose.msra.mxu0 0.0
    %328 = vmatprep.subr.mxu0 0.0
    %329 = vmatpush1.xpose.msra.mxu0 0.0
    %330 = vmatprep.subr.mxu0 0.0
    %331 = vmatpush1.xpose.msra.mxu0 %v308
    %332 = vmatprep.subr.mxu0 0.0
    %333 = vmatpush1.xpose.msra.mxu0 %v305
    %334 = vmatprep.subr.mxu0 0.0
    %335 = vmatpush1.xpose.msra.mxu0 %v302
    %336 = vmatprep.subr.mxu0 0.0
    %337 = vmatpush1.xpose.msra.mxu0 %v299
    %338 = vmatprep.subr.mxu0 0.0
    %339 = vmatpush1.xpose.msra.mxu0 %v296
    %340 = vmatprep.subr.mxu0 0.0
    %341 = vmatpush1.xpose.msra.mxu0 %v293
    %342 = vmatprep.subr.mxu0 0.0
    %343 = vmatpush2.xpose.msra.mxu0 0.0
    %344 = vmatprep.subr.mxu0 0.0
    %345 = vmatpush2.xpose.msra.mxu0 0.0
    %346 = vmatprep.subr.mxu0 0.0
    %347 = vmatpush2.xpose.msra.mxu0 0.0
    %348 = vmatprep.subr.mxu0 0.0
    %349 = vmatpush2.xpose.msra.mxu0 0.0
    %350 = vmatprep.subr.mxu0 0.0
    %351 = vmatpush2.xpose.msra.mxu0 0.0
    %352 = vmatprep.subr.mxu0 0.0
    %353 = vmatpush2.xpose.msra.mxu0 0.0
    %354 = vmatprep.subr.mxu0 0.0
    %355 = vmatpush2.xpose.msra.mxu0 0.0
    %356 = vmatprep.subr.mxu0 0.0
    %357 = vmatpush2.xpose.msra.mxu0 0.0
    %358 = vmatprep.subr.mxu0 0.0
    %359 = vmatpush2.xpose.msra.mxu0 0.0
    %360 = vmatprep.subr.mxu0 0.0
    %361 = vmatpush2.xpose.msra.mxu0 0.0
    %362 = vmatprep.subr.mxu0 0.0
    %363 = vmatpush2.xpose.msra.mxu0 0.0
    %364 = vmatprep.subr.mxu0 0.0
    %365 = vmatpush2.xpose.msra.mxu0 0.0
    %366 = vmatprep.subr.mxu0 0.0
    %367 = vmatpush2.xpose.msra.mxu0 0.0
    %368 = vmatprep.subr.mxu0 0.0
    %369 = vmatpush2.xpose.msra.mxu0 0.0
    %370 = vmatprep.subr.mxu0 0.0
    %371 = vmatpush2.xpose.msra.mxu0 0.0
    %372 = vmatprep.subr.mxu0 0.0
    %373 = vmatpush2.xpose.msra.mxu0 0.0
    %374 = vmatprep.mubr.f32.mxu0 0.0
    %375 = vmatmul.mubr.f32.gmra.mxu0 %v290
    %v376 = vpop.f32.mrf.mxu0
    %v377 = vadd.f32 %v286, %v376
    %v378 = vpop.f32.mrf.mxu0
    %379 = vdwg.mxu0
    %vm380 = vcmask 388096
    %381 = vst.msk [vmem:[#allocation9] sm:$0xf] %vm380, %v377
    %v382 = vld [vmem:[%s3] sm:$0x1f]
    %v383 = vld [vmem:[%s7] sm:$0x1]
    %v385 = vlaneseq
    %v386 = vshrl.u32 %v385, 7
    %v387 = vsub.s32 0, %v386
    %v388 = vrot.slane %v383, %v387
    %vm390 = vcmask 1044480
    %v392 = vsel %vm390, %v382, 0
    %394 = vmatprep.subr.mxu0 0.0
    %395 = vmatpush1.msra.mxu0 0.0
    %396 = vmatprep.subr.mxu0 0.0
    %397 = vmatpush1.msra.mxu0 0.0
    %398 = vmatprep.subr.mxu0 0.0
    %399 = vmatpush1.msra.mxu0 0.0
    %400 = vmatprep.subr.mxu0 0.0
    %401 = vmatpush1.msra.mxu0 0.0
    %402 = vmatprep.subr.mxu0 0.0
    %403 = vmatpush1.msra.mxu0 0.0
    %404 = vmatprep.subr.mxu0 0.0
    %405 = vmatpush1.msra.mxu0 0.0
    %406 = vmatprep.subr.mxu0 0.0
    %407 = vmatpush1.msra.mxu0 0.0
    %408 = vmatprep.subr.mxu0 0.0
    %409 = vmatpush1.msra.mxu0 0.0
    %410 = vmatprep.subr.mxu0 0.0
    %411 = vmatpush1.msra.mxu0 0.0
    %412 = vmatprep.subr.mxu0 0.0
    %413 = vmatpush1.msra.mxu0 0.0
    %414 = vmatprep.subr.mxu0 0.0
    %415 = vmatpush1.msra.mxu0 0.0
    %416 = vmatprep.subr.mxu0 0.0
    %417 = vmatpush1.msra.mxu0 0.0
    %418 = vmatprep.subr.mxu0 0.0
    %419 = vmatpush1.msra.mxu0 0.0
    %420 = vmatprep.subr.mxu0 0.0
    %421 = vmatpush1.msra.mxu0 0.0
    %422 = vmatprep.subr.mxu0 0.0
    %423 = vmatpush1.msra.mxu0 0.0
    %424 = vmatprep.subr.mxu0 0.0
    %425 = vmatpush1.msra.mxu0 %v392
    %426 = vmatprep.subr.mxu0 0.0
    %427 = vmatpush2.msra.mxu0 0.0
    %428 = vmatprep.subr.mxu0 0.0
    %429 = vmatpush2.msra.mxu0 0.0
    %430 = vmatprep.subr.mxu0 0.0
    %431 = vmatpush2.msra.mxu0 0.0
    %432 = vmatprep.subr.mxu0 0.0
    %433 = vmatpush2.msra.mxu0 0.0
    %434 = vmatprep.subr.mxu0 0.0
    %435 = vmatpush2.msra.mxu0 0.0
    %436 = vmatprep.subr.mxu0 0.0
    %437 = vmatpush2.msra.mxu0 0.0
    %438 = vmatprep.subr.mxu0 0.0
    %439 = vmatpush2.msra.mxu0 0.0
    %440 = vmatprep.subr.mxu0 0.0
    %441 = vmatpush2.msra.mxu0 0.0
    %442 = vmatprep.subr.mxu0 0.0
    %443 = vmatpush2.msra.mxu0 0.0
    %444 = vmatprep.subr.mxu0 0.0
    %445 = vmatpush2.msra.mxu0 0.0
    %446 = vmatprep.subr.mxu0 0.0
    %447 = vmatpush2.msra.mxu0 0.0
    %448 = vmatprep.subr.mxu0 0.0
    %449 = vmatpush2.msra.mxu0 0.0
    %450 = vmatprep.subr.mxu0 0.0
    %451 = vmatpush2.msra.mxu0 0.0
    %452 = vmatprep.subr.mxu0 0.0
    %453 = vmatpush2.msra.mxu0 0.0
    %454 = vmatprep.subr.mxu0 0.0
    %455 = vmatpush2.msra.mxu0 0.0
    %456 = vmatprep.subr.mxu0 0.0
    %457 = vmatpush2.msra.mxu0 0.0
    %458 = vmatprep.mubr.f32.mxu0 0.0
    %459 = vmatmul.mubr.f32.gmra.mxu0 %v293
    %v460 = vpop.f32.mrf.mxu0
    %v461 = vadd.f32 %v388, %v460
    %v462 = vpop.f32.mrf.mxu0
    %463 = vmatprep.mubr.f32.mxu0 0.0
    %464 = vmatmul.mubr.f32.gmra.mxu0 %v296
    %v465 = vpop.f32.mrf.mxu0
    %v466 = vadd.f32 %v388, %v465
    %v467 = vpop.f32.mrf.mxu0
    %468 = vmatprep.mubr.f32.mxu0 0.0
    %469 = vmatmul.mubr.f32.gmra.mxu0 %v299
    %v470 = vpop.f32.mrf.mxu0
    %v471 = vadd.f32 %v388, %v470
    %v472 = vpop.f32.mrf.mxu0
    %473 = vmatprep.mubr.f32.mxu0 0.0
    %474 = vmatmul.mubr.f32.gmra.mxu0 %v302
    %v475 = vpop.f32.mrf.mxu0
    %v476 = vadd.f32 %v388, %v475
    %v477 = vpop.f32.mrf.mxu0
    %478 = vmatprep.mubr.f32.mxu0 0.0
    %479 = vmatmul.mubr.f32.gmra.mxu0 %v305
    %v480 = vpop.f32.mrf.mxu0
    %v481 = vadd.f32 %v388, %v480
    %v482 = vpop.f32.mrf.mxu0
    %483 = vmatprep.mubr.f32.mxu0 0.0
    %484 = vmatmul.mubr.f32.gmra.mxu0 %v308
    %v485 = vpop.f32.mrf.mxu0
    %v486 = vadd.f32 %v388, %v485
    %v487 = vpop.f32.mrf.mxu0
    %488 = vdwg.mxu0
    %vm489 = vcmp.gt.f32.partialorder %v461, 0.0
    %vm490 = vcmp.gt.f32.partialorder %v466, 0.0
    %vm491 = vcmp.gt.f32.partialorder %v471, 0.0
    %vm492 = vcmp.gt.f32.partialorder %v476, 0.0
    %vm493 = vcmp.gt.f32.partialorder %v481, 0.0
    %vm494 = vcmp.gt.f32.partialorder %v486, 0.0
    %v495 = vmul.f32 %v461, 0.2
    %v496 = vmul.f32 %v466, 0.2
    %v497 = vmul.f32 %v471, 0.2
    %v498 = vmul.f32 %v476, 0.2
    %v499 = vmul.f32 %v481, 0.2
    %v500 = vmul.f32 %v486, 0.2
    %v501 = vsel %vm489, %v461, %v495
    %v502 = vsel %vm490, %v466, %v496
    %v503 = vsel %vm491, %v471, %v497
    %v504 = vsel %vm492, %v476, %v498
    %v505 = vsel %vm493, %v481, %v499
    %v506 = vsel %vm494, %v486, %v500
    %507 = vst.msk [vmem:[#allocation2] sm:$0xff] %vm274, 0.0
    %508 = vst.msk [vmem:[#allocation2 + $0x8] sm:$0xff] %vm274, 0.0
    %s509 = scalar_lea.vmem [#allocation2], 64
    %510 = vst.msk [vmem:[%s509] sm:$0xff] %vm274, 0.0
    %511 = vst.msk [vmem:[%s509 + $0x8] sm:$0xff] %vm274, 0.0
    %s512 = scalar_lea.vmem [#allocation2], 16
    %513 = vst.msk [vmem:[%s512] sm:$0xff] %vm274, %v501
    %514 = vst.msk [vmem:[%s512 + $0x8] sm:$0xff] %vm274, %v502
    %515 = vst.msk [vmem:[%s512 + $0x10] sm:$0xff] %vm274, %v503
    %516 = vst.msk [vmem:[%s512 + $0x18] sm:$0xff] %vm274, %v504
    %517 = vst.msk [vmem:[%s512 + $0x20] sm:$0xff] %vm274, %v505
    %518 = vst.msk [vmem:[%s512 + $0x28] sm:$0xff] %vm274, %v506
    %v519 = vld [vmem:[#allocation2] sm:$0xff]
    %v520 = vld [vmem:[#allocation2 + $0x18] sm:$0xff]
    %s521 = scalar_lea.vmem [#allocation2], 8
    %v522 = vld [vmem:[%s521] sm:$0xff]
    %v523 = vld [vmem:[%s521 + $0x18] sm:$0xff]
    %v524 = vld [vmem:[%s512] sm:$0xff]
    %v525 = vld [vmem:[%s512 + $0x18] sm:$0xff]
    %s526 = scalar_lea.vmem [#allocation2], 24
    %v527 = vld [vmem:[%s526] sm:$0xff]
    %v528 = vld [vmem:[%s526 + $0x18] sm:$0xff]
    %s529 = scalar_lea.vmem [#allocation2], 32
    %v530 = vld [vmem:[%s529] sm:$0xff]
    %v531 = vld [vmem:[%s529 + $0x18] sm:$0xff]
    %534 = vrot.lane.b32.xlu0 %v522, 4
    %v535 = vpop.permute.xlu0 %534
    %536 = vrot.lane.b32.xlu0 %v523, 4
    %v537 = vpop.permute.xlu0 %536
    %542 = vrot.lane.b32.xlu0 %v524, 8
    %v543 = vpop.permute.xlu0 %542
    %544 = vrot.lane.b32.xlu0 %v525, 8
    %v545 = vpop.permute.xlu0 %544
    %550 = vrot.lane.b32.xlu0 %v527, 12
    %v551 = vpop.permute.xlu0 %550
    %552 = vrot.lane.b32.xlu0 %v528, 12
    %v553 = vpop.permute.xlu0 %552
    %558 = vrot.lane.b32.xlu0 %v530, 16
    %v559 = vpop.permute.xlu0 %558
    %560 = vrot.lane.b32.xlu0 %v531, 16
    %v561 = vpop.permute.xlu0 %560
    %v564 = vsel %vm274, %v519, %v535
    %v565 = vsel %vm274, %v520, %v537
    %vm566 = vcmask 64512
    %v567 = vsel %vm566, %v564, %v543
    %v568 = vsel %vm566, %v565, %v545
    %vm569 = vcmask 97280
    %v570 = vsel %vm569, %v567, %v551
    %v571 = vsel %vm569, %v568, %v553
    %vm572 = vcmask 130048
    %v573 = vsel %vm572, %v570, %v559
    %v574 = vsel %vm572, %v571, %v561
    %v575 = vld [vmem:[%s13] sm:$0xff]
    %v576 = vld [vmem:[%s13 + $0x8] sm:$0xff]
    %v577 = vld [vmem:[%s17] sm:$0xff]
    %v578 = vld [vmem:[%s17 + $0x8] sm:$0xff]
    %580 = vset.pattern.permute.xlu0 0
    %581 = vperm.xlu0 %580, %v577
    %v582 = vpop.permute.xlu0 %581
    %585 = vset.pattern.permute.xlu0 0
    %586 = vperm.xlu0 %585, %v578
    %v587 = vpop.permute.xlu0 %586
    %vm589 = vcmask 162816
    %v591 = vsel %vm589, %v575, 0
    %v594 = vsel %vm589, %v576, 0
    %v597 = vsel %vm589, %v573, 0
    %v600 = vsel %vm589, %v574, 0
    %602 = vmatprep.subr.mxu0 0.0
    %603 = vmatpush1.xpose.msra.mxu0 0.0
    %604 = vmatprep.subr.mxu0 0.0
    %605 = vmatpush1.xpose.msra.mxu0 0.0
    %606 = vmatprep.subr.mxu0 0.0
    %607 = vmatpush1.xpose.msra.mxu0 0.0
    %608 = vmatprep.subr.mxu0 0.0
    %609 = vmatpush1.xpose.msra.mxu0 0.0
    %610 = vmatprep.subr.mxu0 0.0
    %611 = vmatpush1.xpose.msra.mxu0 0.0
    %612 = vmatprep.subr.mxu0 0.0
    %613 = vmatpush1.xpose.msra.mxu0 0.0
    %614 = vmatprep.subr.mxu0 0.0
    %615 = vmatpush1.xpose.msra.mxu0 0.0
    %616 = vmatprep.subr.mxu0 0.0
    %617 = vmatpush1.xpose.msra.mxu0 0.0
    %618 = vmatprep.subr.mxu0 0.0
    %619 = vmatpush1.xpose.msra.mxu0 0.0
    %620 = vmatprep.subr.mxu0 0.0
    %621 = vmatpush1.xpose.msra.mxu0 0.0
    %622 = vmatprep.subr.mxu0 0.0
    %623 = vmatpush1.xpose.msra.mxu0 0.0
    %624 = vmatprep.subr.mxu0 0.0
    %625 = vmatpush1.xpose.msra.mxu0 0.0
    %626 = vmatprep.subr.mxu0 0.0
    %627 = vmatpush1.xpose.msra.mxu0 0.0
    %628 = vmatprep.subr.mxu0 0.0
    %629 = vmatpush1.xpose.msra.mxu0 0.0
    %630 = vmatprep.subr.mxu0 0.0
    %631 = vmatpush1.xpose.msra.mxu0 %v600
    %632 = vmatprep.subr.mxu0 0.0
    %633 = vmatpush1.xpose.msra.mxu0 %v597
    %634 = vmatprep.subr.mxu0 0.0
    %635 = vmatpush2.xpose.msra.mxu0 0.0
    %636 = vmatprep.subr.mxu0 0.0
    %637 = vmatpush2.xpose.msra.mxu0 0.0
    %638 = vmatprep.subr.mxu0 0.0
    %639 = vmatpush2.xpose.msra.mxu0 0.0
    %640 = vmatprep.subr.mxu0 0.0
    %641 = vmatpush2.xpose.msra.mxu0 0.0
    %642 = vmatprep.subr.mxu0 0.0
    %643 = vmatpush2.xpose.msra.mxu0 0.0
    %644 = vmatprep.subr.mxu0 0.0
    %645 = vmatpush2.xpose.msra.mxu0 0.0
    %646 = vmatprep.subr.mxu0 0.0
    %647 = vmatpush2.xpose.msra.mxu0 0.0
    %648 = vmatprep.subr.mxu0 0.0
    %649 = vmatpush2.xpose.msra.mxu0 0.0
    %650 = vmatprep.subr.mxu0 0.0
    %651 = vmatpush2.xpose.msra.mxu0 0.0
    %652 = vmatprep.subr.mxu0 0.0
    %653 = vmatpush2.xpose.msra.mxu0 0.0
    %654 = vmatprep.subr.mxu0 0.0
    %655 = vmatpush2.xpose.msra.mxu0 0.0
    %656 = vmatprep.subr.mxu0 0.0
    %657 = vmatpush2.xpose.msra.mxu0 0.0
    %658 = vmatprep.subr.mxu0 0.0
    %659 = vmatpush2.xpose.msra.mxu0 0.0
    %660 = vmatprep.subr.mxu0 0.0
    %661 = vmatpush2.xpose.msra.mxu0 0.0
    %662 = vmatprep.subr.mxu0 0.0
    %663 = vmatpush2.xpose.msra.mxu0 0.0
    %664 = vmatprep.subr.mxu0 0.0
    %665 = vmatpush2.xpose.msra.mxu0 0.0
    %666 = vmatprep.mubr.f32.mxu0 0.0
    %667 = vmatmul.mubr.f32.gmra.mxu0 %v591
    %v668 = vpop.f32.mrf.mxu0
    %v669 = vadd.f32 %v582, %v668
    %v670 = vpop.f32.mrf.mxu0
    %671 = vmatprep.mubr.f32.mxu0 0.0
    %672 = vmatmul.mubr.f32.gmra.mxu0 %v594
    %v673 = vpop.f32.mrf.mxu0
    %v674 = vadd.f32 %v587, %v673
    %v675 = vpop.f32.mrf.mxu0
    %676 = vdwg.mxu0
    %677 = vst.msk [vmem:[#allocation11] sm:$0xff] %vm572, %v669
    %678 = vst.msk [vmem:[#allocation11 + $0x8] sm:$0xff] %vm572, %v674
    %v679 = vld [vmem:[%s11] sm:$0xff]
    %v680 = vld [vmem:[%s11 + $0x8] sm:$0xff]
    %v681 = vld [vmem:[%s11 + $0x10] sm:$0xf]
    %v682 = vld [vmem:[%s15] sm:$0x1]
    %v684 = vlaneseq
    %v685 = vshrl.u32 %v684, 7
    %v686 = vsub.s32 0, %v685
    %v687 = vrot.slane %v682, %v686
    %vm689 = vcmask 1043456
    %v691 = vsel %vm689, %v681, 0
    %693 = vmatprep.subr.mxu0 0.0
    %694 = vmatpush1.msra.mxu0 0.0
    %695 = vmatprep.subr.mxu0 0.0
    %696 = vmatpush1.msra.mxu0 0.0
    %697 = vmatprep.subr.mxu0 0.0
    %698 = vmatpush1.msra.mxu0 0.0
    %699 = vmatprep.subr.mxu0 0.0
    %700 = vmatpush1.msra.mxu0 0.0
    %701 = vmatprep.subr.mxu0 0.0
    %702 = vmatpush1.msra.mxu0 0.0
    %703 = vmatprep.subr.mxu0 0.0
    %704 = vmatpush1.msra.mxu0 0.0
    %705 = vmatprep.subr.mxu0 0.0
    %706 = vmatpush1.msra.mxu0 0.0
    %707 = vmatprep.subr.mxu0 0.0
    %708 = vmatpush1.msra.mxu0 0.0
    %709 = vmatprep.subr.mxu0 0.0
    %710 = vmatpush1.msra.mxu0 0.0
    %711 = vmatprep.subr.mxu0 0.0
    %712 = vmatpush1.msra.mxu0 0.0
    %713 = vmatprep.subr.mxu0 0.0
    %714 = vmatpush1.msra.mxu0 0.0
    %715 = vmatprep.subr.mxu0 0.0
    %716 = vmatpush1.msra.mxu0 0.0
    %717 = vmatprep.subr.mxu0 0.0
    %718 = vmatpush1.msra.mxu0 0.0
    %719 = vmatprep.subr.mxu0 0.0
    %720 = vmatpush1.msra.mxu0 %v691
    %721 = vmatprep.subr.mxu0 0.0
    %722 = vmatpush1.msra.mxu0 %v680
    %723 = vmatprep.subr.mxu0 0.0
    %724 = vmatpush1.msra.mxu0 %v679
    %725 = vmatprep.subr.mxu0 0.0
    %726 = vmatpush2.msra.mxu0 0.0
    %727 = vmatprep.subr.mxu0 0.0
    %728 = vmatpush2.msra.mxu0 0.0
    %729 = vmatprep.subr.mxu0 0.0
    %730 = vmatpush2.msra.mxu0 0.0
    %731 = vmatprep.subr.mxu0 0.0
    %732 = vmatpush2.msra.mxu0 0.0
    %733 = vmatprep.subr.mxu0 0.0
    %734 = vmatpush2.msra.mxu0 0.0
    %735 = vmatprep.subr.mxu0 0.0
    %736 = vmatpush2.msra.mxu0 0.0
    %737 = vmatprep.subr.mxu0 0.0
    %738 = vmatpush2.msra.mxu0 0.0
    %739 = vmatprep.subr.mxu0 0.0
    %740 = vmatpush2.msra.mxu0 0.0
    %741 = vmatprep.subr.mxu0 0.0
    %742 = vmatpush2.msra.mxu0 0.0
    %743 = vmatprep.subr.mxu0 0.0
    %744 = vmatpush2.msra.mxu0 0.0
    %745 = vmatprep.subr.mxu0 0.0
    %746 = vmatpush2.msra.mxu0 0.0
    %747 = vmatprep.subr.mxu0 0.0
    %748 = vmatpush2.msra.mxu0 0.0
    %749 = vmatprep.subr.mxu0 0.0
    %750 = vmatpush2.msra.mxu0 0.0
    %751 = vmatprep.subr.mxu0 0.0
    %752 = vmatpush2.msra.mxu0 0.0
    %753 = vmatprep.subr.mxu0 0.0
    %754 = vmatpush2.msra.mxu0 0.0
    %755 = vmatprep.subr.mxu0 0.0
    %756 = vmatpush2.msra.mxu0 0.0
    %757 = vmatprep.mubr.f32.mxu0 0.0
    %758 = vmatmul.mubr.f32.gmra.mxu0 %v597
    %v759 = vpop.f32.mrf.mxu0
    %v760 = vadd.f32 %v687, %v759
    %v761 = vpop.f32.mrf.mxu0
    %762 = vmatprep.mubr.f32.mxu0 0.0
    %763 = vmatmul.mubr.f32.gmra.mxu0 %v600
    %v764 = vpop.f32.mrf.mxu0
    %v765 = vadd.f32 %v687, %v764
    %v766 = vpop.f32.mrf.mxu0
    %767 = vdwg.mxu0
    %vm768 = vcmp.gt.f32.partialorder %v760, 0.0
    %vm769 = vcmp.gt.f32.partialorder %v765, 0.0
    %v770 = vmul.f32 %v760, 0.2
    %v771 = vmul.f32 %v765, 0.2
    %v772 = vsel %vm768, %v760, %v770
    %v773 = vsel %vm769, %v765, %v771
    %774 = vst.msk [vmem:[#allocation3] sm:$0xff] %vm572, 0.0
    %775 = vst.msk [vmem:[#allocation3 + $0x8] sm:$0xff] %vm572, 0.0
    %s776 = scalar_lea.vmem [#allocation3], 32
    %777 = vst.msk [vmem:[%s776] sm:$0xff] %vm572, 0.0
    %778 = vst.msk [vmem:[%s776 + $0x8] sm:$0xff] %vm572, 0.0
    %s779 = scalar_lea.vmem [#allocation3], 16
    %780 = vst.msk [vmem:[%s779] sm:$0xff] %vm572, %v772
    %781 = vst.msk [vmem:[%s779 + $0x8] sm:$0xff] %vm572, %v773
    %v782 = vld [vmem:[#allocation3] sm:$0xff]
    %s783 = scalar_lea.vmem [#allocation3], 8
    %v784 = vld [vmem:[%s783] sm:$0xff]
    %v785 = vld [vmem:[%s779] sm:$0xff]
    %s786 = scalar_lea.vmem [#allocation3], 24
    %v787 = vld [vmem:[%s786] sm:$0xff]
    %v788 = vld [vmem:[%s776] sm:$0xff]
    %790 = vrot.lane.b32.xlu0 %v784, 16
    %v791 = vpop.permute.xlu0 %790
    %794 = vrot.lane.b32.xlu0 %v785, 32
    %v795 = vpop.permute.xlu0 %794
    %798 = vrot.lane.b32.xlu0 %v787, 48
    %v799 = vpop.permute.xlu0 %798
    %802 = vrot.lane.b32.xlu0 %v788, 64
    %v803 = vpop.permute.xlu0 %802
    %v805 = vsel %vm572, %v782, %v791
    %vm806 = vcmask 261120
    %v807 = vsel %vm806, %v805, %v795
    %vm808 = vcmask 392192
    %v809 = vsel %vm808, %v807, %v799
    %vm810 = vcmask 523264
    %v811 = vsel %vm810, %v809, %v803
    %v812 = vld [vmem:[%s21] sm:$0xff]
    %v813 = vld [vmem:[%s21 + $0x8] sm:$0xff]
    %v814 = vld [vmem:[%s21 + $0x10] sm:$0xff]
    %v815 = vld [vmem:[%s21 + $0x18] sm:$0xff]
    %v816 = vld [vmem:[%s25] sm:$0xff]
    %v817 = vld [vmem:[%s25 + $0x8] sm:$0xff]
    %v818 = vld [vmem:[%s25 + $0x10] sm:$0xff]
    %v819 = vld [vmem:[%s25 + $0x18] sm:$0xff]
    %821 = vset.pattern.permute.xlu0 0
    %822 = vperm.xlu0 %821, %v816
    %v823 = vpop.permute.xlu0 %822
    %826 = vset.pattern.permute.xlu0 0
    %827 = vperm.xlu0 %826, %v817
    %v828 = vpop.permute.xlu0 %827
    %831 = vset.pattern.permute.xlu0 0
    %832 = vperm.xlu0 %831, %v818
    %v833 = vpop.permute.xlu0 %832
    %836 = vset.pattern.permute.xlu0 0
    %837 = vperm.xlu0 %836, %v819
    %v838 = vpop.permute.xlu0 %837
    %vm840 = vcmask 654336
    %v842 = vsel %vm840, %v812, 0
    %v845 = vsel %vm840, %v813, 0
    %v848 = vsel %vm840, %v814, 0
    %v851 = vsel %vm840, %v815, 0
    %v854 = vsel %vm840, %v811, 0
    %856 = vmatprep.subr.mxu0 0.0
    %857 = vmatpush1.xpose.msra.mxu0 0.0
    %858 = vmatprep.subr.mxu0 0.0
    %859 = vmatpush1.xpose.msra.mxu0 0.0
    %860 = vmatprep.subr.mxu0 0.0
    %861 = vmatpush1.xpose.msra.mxu0 0.0
    %862 = vmatprep.subr.mxu0 0.0
    %863 = vmatpush1.xpose.msra.mxu0 0.0
    %864 = vmatprep.subr.mxu0 0.0
    %865 = vmatpush1.xpose.msra.mxu0 0.0
    %866 = vmatprep.subr.mxu0 0.0
    %867 = vmatpush1.xpose.msra.mxu0 0.0
    %868 = vmatprep.subr.mxu0 0.0
    %869 = vmatpush1.xpose.msra.mxu0 0.0
    %870 = vmatprep.subr.mxu0 0.0
    %871 = vmatpush1.xpose.msra.mxu0 0.0
    %872 = vmatprep.subr.mxu0 0.0
    %873 = vmatpush1.xpose.msra.mxu0 0.0
    %874 = vmatprep.subr.mxu0 0.0
    %875 = vmatpush1.xpose.msra.mxu0 0.0
    %876 = vmatprep.subr.mxu0 0.0
    %877 = vmatpush1.xpose.msra.mxu0 0.0
    %878 = vmatprep.subr.mxu0 0.0
    %879 = vmatpush1.xpose.msra.mxu0 0.0
    %880 = vmatprep.subr.mxu0 0.0
    %881 = vmatpush1.xpose.msra.mxu0 0.0
    %882 = vmatprep.subr.mxu0 0.0
    %883 = vmatpush1.xpose.msra.mxu0 0.0
    %884 = vmatprep.subr.mxu0 0.0
    %885 = vmatpush1.xpose.msra.mxu0 0.0
    %886 = vmatprep.subr.mxu0 0.0
    %887 = vmatpush1.xpose.msra.mxu0 %v854
    %888 = vmatprep.subr.mxu0 0.0
    %889 = vmatpush2.xpose.msra.mxu0 0.0
    %890 = vmatprep.subr.mxu0 0.0
    %891 = vmatpush2.xpose.msra.mxu0 0.0
    %892 = vmatprep.subr.mxu0 0.0
    %893 = vmatpush2.xpose.msra.mxu0 0.0
    %894 = vmatprep.subr.mxu0 0.0
    %895 = vmatpush2.xpose.msra.mxu0 0.0
    %896 = vmatprep.subr.mxu0 0.0
    %897 = vmatpush2.xpose.msra.mxu0 0.0
    %898 = vmatprep.subr.mxu0 0.0
    %899 = vmatpush2.xpose.msra.mxu0 0.0
    %900 = vmatprep.subr.mxu0 0.0
    %901 = vmatpush2.xpose.msra.mxu0 0.0
    %902 = vmatprep.subr.mxu0 0.0
    %903 = vmatpush2.xpose.msra.mxu0 0.0
    %904 = vmatprep.subr.mxu0 0.0
    %905 = vmatpush2.xpose.msra.mxu0 0.0
    %906 = vmatprep.subr.mxu0 0.0
    %907 = vmatpush2.xpose.msra.mxu0 0.0
    %908 = vmatprep.subr.mxu0 0.0
    %909 = vmatpush2.xpose.msra.mxu0 0.0
    %910 = vmatprep.subr.mxu0 0.0
    %911 = vmatpush2.xpose.msra.mxu0 0.0
    %912 = vmatprep.subr.mxu0 0.0
    %913 = vmatpush2.xpose.msra.mxu0 0.0
    %914 = vmatprep.subr.mxu0 0.0
    %915 = vmatpush2.xpose.msra.mxu0 0.0
    %916 = vmatprep.subr.mxu0 0.0
    %917 = vmatpush2.xpose.msra.mxu0 0.0
    %918 = vmatprep.subr.mxu0 0.0
    %919 = vmatpush2.xpose.msra.mxu0 0.0
    %920 = vmatprep.mubr.f32.mxu0 0.0
    %921 = vmatmul.mubr.f32.gmra.mxu0 %v842
    %v922 = vpop.f32.mrf.mxu0
    %v923 = vadd.f32 %v823, %v922
    %v924 = vpop.f32.mrf.mxu0
    %925 = vmatprep.mubr.f32.mxu0 0.0
    %926 = vmatmul.mubr.f32.gmra.mxu0 %v845
    %v927 = vpop.f32.mrf.mxu0
    %v928 = vadd.f32 %v828, %v927
    %v929 = vpop.f32.mrf.mxu0
    %930 = vmatprep.mubr.f32.mxu0 0.0
    %931 = vmatmul.mubr.f32.gmra.mxu0 %v848
    %v932 = vpop.f32.mrf.mxu0
    %v933 = vadd.f32 %v833, %v932
    %v934 = vpop.f32.mrf.mxu0
    %935 = vmatprep.mubr.f32.mxu0 0.0
    %936 = vmatmul.mubr.f32.gmra.mxu0 %v851
    %v937 = vpop.f32.mrf.mxu0
    %v938 = vadd.f32 %v838, %v937
    %v939 = vpop.f32.mrf.mxu0
    %940 = vdwg.mxu0
    %941 = vst.msk [vmem:[%s55] sm:$0xff] %vm566, %v923
    %942 = vst.msk [vmem:[%s55 + $0x8] sm:$0xff] %vm566, %v928
    %943 = vst.msk [vmem:[%s55 + $0x10] sm:$0xff] %vm566, %v933
    %944 = vst.msk [vmem:[%s55 + $0x18] sm:$0xff] %vm566, %v938
    %v945 = vld [vmem:[%s19] sm:$0xff]
    %v946 = vld [vmem:[%s19 + $0x8] sm:$0xff]
    %v947 = vld [vmem:[%s19 + $0x10] sm:$0xff]
    %v948 = vld [vmem:[%s19 + $0x18] sm:$0xff]
    %v949 = vld [vmem:[%s19 + $0x20] sm:$0xff]
    %v950 = vld [vmem:[%s19 + $0x28] sm:$0xff]
    %v951 = vld [vmem:[%s19 + $0x30] sm:$0xff]
    %v952 = vld [vmem:[%s19 + $0x38] sm:$0xff]
    %v953 = vld [vmem:[%s19 + $0x40] sm:$0xff]
    %v954 = vld [vmem:[%s19 + $0x48] sm:$0xff]
    %v955 = vld [vmem:[%s23] sm:$0x1]
    %v957 = vlaneseq
    %v958 = vshrl.u32 %v957, 7
    %v959 = vsub.s32 0, %v958
    %v960 = vrot.slane %v955, %v959
    %962 = vmatprep.subr.mxu0 0.0
    %963 = vmatpush1.msra.mxu0 0.0
    %964 = vmatprep.subr.mxu0 0.0
    %965 = vmatpush1.msra.mxu0 0.0
    %966 = vmatprep.subr.mxu0 0.0
    %967 = vmatpush1.msra.mxu0 0.0
    %968 = vmatprep.subr.mxu0 0.0
    %969 = vmatpush1.msra.mxu0 0.0
    %970 = vmatprep.subr.mxu0 0.0
    %971 = vmatpush1.msra.mxu0 0.0
    %972 = vmatprep.subr.mxu0 0.0
    %973 = vmatpush1.msra.mxu0 0.0
    %974 = vmatprep.subr.mxu0 0.0
    %975 = vmatpush1.msra.mxu0 %v954
    %976 = vmatprep.subr.mxu0 0.0
    %977 = vmatpush1.msra.mxu0 %v953
    %978 = vmatprep.subr.mxu0 0.0
    %979 = vmatpush1.msra.mxu0 %v952
    %980 = vmatprep.subr.mxu0 0.0
    %981 = vmatpush1.msra.mxu0 %v951
    %982 = vmatprep.subr.mxu0 0.0
    %983 = vmatpush1.msra.mxu0 %v950
    %984 = vmatprep.subr.mxu0 0.0
    %985 = vmatpush1.msra.mxu0 %v949
    %986 = vmatprep.subr.mxu0 0.0
    %987 = vmatpush1.msra.mxu0 %v948
    %988 = vmatprep.subr.mxu0 0.0
    %989 = vmatpush1.msra.mxu0 %v947
    %990 = vmatprep.subr.mxu0 0.0
    %991 = vmatpush1.msra.mxu0 %v946
    %992 = vmatprep.subr.mxu0 0.0
    %993 = vmatpush1.msra.mxu0 %v945
    %994 = vmatprep.subr.mxu0 0.0
    %995 = vmatpush2.msra.mxu0 0.0
    %996 = vmatprep.subr.mxu0 0.0
    %997 = vmatpush2.msra.mxu0 0.0
    %998 = vmatprep.subr.mxu0 0.0
    %999 = vmatpush2.msra.mxu0 0.0
    %1000 = vmatprep.subr.mxu0 0.0
    %1001 = vmatpush2.msra.mxu0 0.0
    %1002 = vmatprep.subr.mxu0 0.0
    %1003 = vmatpush2.msra.mxu0 0.0
    %1004 = vmatprep.subr.mxu0 0.0
    %1005 = vmatpush2.msra.mxu0 0.0
    %1006 = vmatprep.subr.mxu0 0.0
    %1007 = vmatpush2.msra.mxu0 0.0
    %1008 = vmatprep.subr.mxu0 0.0
    %1009 = vmatpush2.msra.mxu0 0.0
    %1010 = vmatprep.subr.mxu0 0.0
    %1011 = vmatpush2.msra.mxu0 0.0
    %1012 = vmatprep.subr.mxu0 0.0
    %1013 = vmatpush2.msra.mxu0 0.0
    %1014 = vmatprep.subr.mxu0 0.0
    %1015 = vmatpush2.msra.mxu0 0.0
    %1016 = vmatprep.subr.mxu0 0.0
    %1017 = vmatpush2.msra.mxu0 0.0
    %1018 = vmatprep.subr.mxu0 0.0
    %1019 = vmatpush2.msra.mxu0 0.0
    %1020 = vmatprep.subr.mxu0 0.0
    %1021 = vmatpush2.msra.mxu0 0.0
    %1022 = vmatprep.subr.mxu0 0.0
    %1023 = vmatpush2.msra.mxu0 0.0
    %1024 = vmatprep.subr.mxu0 0.0
    %1025 = vmatpush2.msra.mxu0 0.0
    %1026 = vmatprep.mubr.f32.mxu0 0.0
    %1027 = vmatmul.mubr.f32.gmra.mxu0 %v854
    %v1028 = vpop.f32.mrf.mxu0
    %v1029 = vadd.f32 %v960, %v1028
    %v1030 = vpop.f32.mrf.mxu0
    %1031 = vdwg.mxu0
    %vm1032 = vcmp.gt.f32.partialorder %v1029, 0.0
    %v1033 = vmul.f32 %v1029, 0.2
    %v1034 = vsel %vm1032, %v1029, %v1033
    %1035 = vst.msk [vmem:[#allocation4] sm:$0xff] %vm806, 0.0
    %1036 = vst.msk [vmem:[#allocation4 + $0x8] sm:$0xff] %vm806, 0.0
    %s1037 = scalar_lea.vmem [#allocation4], 24
    %1038 = vst.msk [vmem:[%s1037] sm:$0xff] %vm806, 0.0
    %1039 = vst.msk [vmem:[%s1037 + $0x8] sm:$0xff] %vm806, 0.0
    %s1040 = scalar_lea.vmem [#allocation4], 16
    %1041 = vst.msk [vmem:[%s1040] sm:$0xff] %vm806, %v1034
    %v1042 = vld [vmem:[#allocation4] sm:$0xff]
    %s1043 = scalar_lea.vmem [#allocation4], 8
    %v1044 = vld [vmem:[%s1043] sm:$0xff]
    %v1045 = vld [vmem:[%s1040] sm:$0xff]
    %v1046 = vld [vmem:[%s1037] sm:$0xff]
    %s1047 = scalar_lea.vmem [#allocation4], 32
    %v1048 = vld [vmem:[%s1047] sm:$0xff]
    %1050 = vrot.lane.b32.xlu0 %v1044, 32
    %v1051 = vpop.permute.xlu0 %1050
    %1054 = vrot.lane.b32.xlu0 %v1045, 64
    %v1055 = vpop.permute.xlu0 %1054
    %1058 = vrot.lane.b32.xlu0 %v1046, 96
    %v1059 = vpop.permute.xlu0 %1058
    %v1061 = vsel %vm806, %v1042, %v1051
    %v1062 = vsel %vm810, %v1061, %v1055
    %vm1063 = vcmask 785408
    %v1064 = vsel %vm1063, %v1062, %v1059
    %v1065 = vld [vmem:[%s29] sm:$0xff]
    %v1066 = vld [vmem:[%s29 + $0x8] sm:$0xff]
    %v1067 = vld [vmem:[%s29 + $0x10] sm:$0xff]
    %v1068 = vld [vmem:[%s29 + $0x18] sm:$0xff]
    %v1069 = vld [vmem:[%s29 + $0x20] sm:$0xff]
    %v1070 = vld [vmem:[%s29 + $0x28] sm:$0xff]
    %v1071 = vld [vmem:[%s29 + $0x30] sm:$0xff]
    %v1072 = vld [vmem:[%s29 + $0x38] sm:$0xff]
    %v1073 = vld [vmem:[%s33] sm:$0xff]
    %v1074 = vld [vmem:[%s33 + $0x8] sm:$0xff]
    %v1075 = vld [vmem:[%s33 + $0x10] sm:$0xff]
    %v1076 = vld [vmem:[%s33 + $0x18] sm:$0xff]
    %1078 = vset.pattern.permute.xlu0 0
    %1079 = vperm.xlu0 %1078, %v1073
    %v1080 = vpop.permute.xlu0 %1079
    %1083 = vset.pattern.permute.xlu0 0
    %1084 = vperm.xlu0 %1083, %v1074
    %v1085 = vpop.permute.xlu0 %1084
    %1088 = vset.pattern.permute.xlu0 0
    %1089 = vperm.xlu0 %1088, %v1075
    %v1090 = vpop.permute.xlu0 %1089
    %1093 = vset.pattern.permute.xlu0 0
    %1094 = vperm.xlu0 %1093, %v1076
    %v1095 = vpop.permute.xlu0 %1094
    %v1098 = vsel %vm806, %v1066, 0
    %v1101 = vsel %vm806, %v1068, 0
    %v1104 = vsel %vm806, %v1070, 0
    %v1107 = vsel %vm806, %v1072, 0
    %v1110 = vsel %vm806, %v1048, 0
    %1112 = vmatprep.subr.mxu0 0.0
    %1113 = vmatpush1.xpose.msra.mxu0 0.0
    %1114 = vmatprep.subr.mxu0 0.0
    %1115 = vmatpush1.xpose.msra.mxu0 0.0
    %1116 = vmatprep.subr.mxu0 0.0
    %1117 = vmatpush1.xpose.msra.mxu0 0.0
    %1118 = vmatprep.subr.mxu0 0.0
    %1119 = vmatpush1.xpose.msra.mxu0 0.0
    %1120 = vmatprep.subr.mxu0 0.0
    %1121 = vmatpush1.xpose.msra.mxu0 0.0
    %1122 = vmatprep.subr.mxu0 0.0
    %1123 = vmatpush1.xpose.msra.mxu0 0.0
    %1124 = vmatprep.subr.mxu0 0.0
    %1125 = vmatpush1.xpose.msra.mxu0 0.0
    %1126 = vmatprep.subr.mxu0 0.0
    %1127 = vmatpush1.xpose.msra.mxu0 0.0
    %1128 = vmatprep.subr.mxu0 0.0
    %1129 = vmatpush1.xpose.msra.mxu0 0.0
    %1130 = vmatprep.subr.mxu0 0.0
    %1131 = vmatpush1.xpose.msra.mxu0 0.0
    %1132 = vmatprep.subr.mxu0 0.0
    %1133 = vmatpush1.xpose.msra.mxu0 0.0
    %1134 = vmatprep.subr.mxu0 0.0
    %1135 = vmatpush1.xpose.msra.mxu0 0.0
    %1136 = vmatprep.subr.mxu0 0.0
    %1137 = vmatpush1.xpose.msra.mxu0 0.0
    %1138 = vmatprep.subr.mxu0 0.0
    %1139 = vmatpush1.xpose.msra.mxu0 0.0
    %1140 = vmatprep.subr.mxu0 0.0
    %1141 = vmatpush1.xpose.msra.mxu0 0.0
    %1142 = vmatprep.subr.mxu0 %v1110
    %1143 = vmatpush1.xpose.msra.mxu0 %v1064
    %1144 = vmatprep.subr.mxu0 0.0
    %1145 = vmatpush2.xpose.msra.mxu0 0.0
    %1146 = vmatprep.subr.mxu0 0.0
    %1147 = vmatpush2.xpose.msra.mxu0 0.0
    %1148 = vmatprep.subr.mxu0 0.0
    %1149 = vmatpush2.xpose.msra.mxu0 0.0
    %1150 = vmatprep.subr.mxu0 0.0
    %1151 = vmatpush2.xpose.msra.mxu0 0.0
    %1152 = vmatprep.subr.mxu0 0.0
    %1153 = vmatpush2.xpose.msra.mxu0 0.0
    %1154 = vmatprep.subr.mxu0 0.0
    %1155 = vmatpush2.xpose.msra.mxu0 0.0
    %1156 = vmatprep.subr.mxu0 0.0
    %1157 = vmatpush2.xpose.msra.mxu0 0.0
    %1158 = vmatprep.subr.mxu0 0.0
    %1159 = vmatpush2.xpose.msra.mxu0 0.0
    %1160 = vmatprep.subr.mxu0 0.0
    %1161 = vmatpush2.xpose.msra.mxu0 0.0
    %1162 = vmatprep.subr.mxu0 0.0
    %1163 = vmatpush2.xpose.msra.mxu0 0.0
    %1164 = vmatprep.subr.mxu0 0.0
    %1165 = vmatpush2.xpose.msra.mxu0 0.0
    %1166 = vmatprep.subr.mxu0 0.0
    %1167 = vmatpush2.xpose.msra.mxu0 0.0
    %1168 = vmatprep.subr.mxu0 0.0
    %1169 = vmatpush2.xpose.msra.mxu0 0.0
    %1170 = vmatprep.subr.mxu0 0.0
    %1171 = vmatpush2.xpose.msra.mxu0 0.0
    %1172 = vmatprep.subr.mxu0 0.0
    %1173 = vmatpush2.xpose.msra.mxu0 0.0
    %1174 = vmatprep.subr.mxu0 0.0
    %1175 = vmatpush2.xpose.msra.mxu0 0.0
    %1176 = vmatprep.mubr.f32.mxu0 %v1098
    %1177 = vmatmul.mubr.f32.gmra.mxu0 %v1065
    %v1178 = vpop.f32.mrf.mxu0
    %v1179 = vadd.f32 %v1080, %v1178
    %v1180 = vpop.f32.mrf.mxu0
    %1181 = vmatprep.mubr.f32.mxu0 %v1101
    %1182 = vmatmul.mubr.f32.gmra.mxu0 %v1067
    %v1183 = vpop.f32.mrf.mxu0
    %v1184 = vadd.f32 %v1085, %v1183
    %v1185 = vpop.f32.mrf.mxu0
    %1186 = vmatprep.mubr.f32.mxu0 %v1104
    %1187 = vmatmul.mubr.f32.gmra.mxu0 %v1069
    %v1188 = vpop.f32.mrf.mxu0
    %v1189 = vadd.f32 %v1090, %v1188
    %v1190 = vpop.f32.mrf.mxu0
    %1191 = vmatprep.mubr.f32.mxu0 %v1107
    %1192 = vmatmul.mubr.f32.gmra.mxu0 %v1071
    %v1193 = vpop.f32.mrf.mxu0
    %v1194 = vadd.f32 %v1095, %v1193
    %v1195 = vpop.f32.mrf.mxu0
    %1196 = vdwg.mxu0
    %1197 = vst.msk [vmem:[%s57] sm:$0xff] %vm566, %v1179
    %1198 = vst.msk [vmem:[%s57 + $0x8] sm:$0xff] %vm566, %v1184
    %1199 = vst.msk [vmem:[%s57 + $0x10] sm:$0xff] %vm566, %v1189
    %1200 = vst.msk [vmem:[%s57 + $0x18] sm:$0xff] %vm566, %v1194
    %v1201 = vld [vmem:[%s27] sm:$0xff]
    %v1202 = vld [vmem:[%s27 + $0x8] sm:$0xff]
    %v1203 = vld [vmem:[%s27 + $0x10] sm:$0xff]
    %v1204 = vld [vmem:[%s27 + $0x18] sm:$0xff]
    %v1205 = vld [vmem:[%s27 + $0x20] sm:$0xff]
    %v1206 = vld [vmem:[%s27 + $0x28] sm:$0xff]
    %v1207 = vld [vmem:[%s27 + $0x30] sm:$0xff]
    %v1208 = vld [vmem:[%s27 + $0x38] sm:$0xff]
    %v1209 = vld [vmem:[%s27 + $0x40] sm:$0xff]
    %v1210 = vld [vmem:[%s27 + $0x48] sm:$0xff]
    %v1211 = vld [vmem:[%s27 + $0x50] sm:$0xff]
    %v1212 = vld [vmem:[%s27 + $0x58] sm:$0xff]
    %v1213 = vld [vmem:[%s27 + $0x60] sm:$0xff]
    %v1214 = vld [vmem:[%s27 + $0x68] sm:$0xff]
    %v1215 = vld [vmem:[%s27 + $0x70] sm:$0xff]
    %v1216 = vld [vmem:[%s27 + $0x78] sm:$0xff]
    %v1217 = vld [vmem:[%s27 + $0x80] sm:$0xff]
    %v1218 = vld [vmem:[%s27 + $0x88] sm:$0xff]
    %v1219 = vld [vmem:[%s27 + $0x90] sm:$0xff]
    %v1220 = vld [vmem:[%s27 + $0x98] sm:$0xff]
    %v1221 = vld [vmem:[%s31] sm:$0x1]
    %v1223 = vlaneseq
    %v1224 = vshrl.u32 %v1223, 7
    %v1225 = vsub.s32 0, %v1224
    %v1226 = vrot.slane %v1221, %v1225
    %1228 = vmatprep.subr.mxu0 0.0
    %1229 = vmatpush1.msra.mxu0 %v1216
    %1230 = vmatprep.subr.mxu0 0.0
    %1231 = vmatpush1.msra.mxu0 %v1215
    %1232 = vmatprep.subr.mxu0 0.0
    %1233 = vmatpush1.msra.mxu0 %v1214
    %1234 = vmatprep.subr.mxu0 0.0
    %1235 = vmatpush1.msra.mxu0 %v1213
    %1236 = vmatprep.subr.mxu0 0.0
    %1237 = vmatpush1.msra.mxu0 %v1212
    %1238 = vmatprep.subr.mxu0 0.0
    %1239 = vmatpush1.msra.mxu0 %v1211
    %1240 = vmatprep.subr.mxu0 0.0
    %1241 = vmatpush1.msra.mxu0 %v1210
    %1242 = vmatprep.subr.mxu0 0.0
    %1243 = vmatpush1.msra.mxu0 %v1209
    %1244 = vmatprep.subr.mxu0 0.0
    %1245 = vmatpush1.msra.mxu0 %v1208
    %1246 = vmatprep.subr.mxu0 0.0
    %1247 = vmatpush1.msra.mxu0 %v1207
    %1248 = vmatprep.subr.mxu0 0.0
    %1249 = vmatpush1.msra.mxu0 %v1206
    %1250 = vmatprep.subr.mxu0 0.0
    %1251 = vmatpush1.msra.mxu0 %v1205
    %1252 = vmatprep.subr.mxu0 0.0
    %1253 = vmatpush1.msra.mxu0 %v1204
    %1254 = vmatprep.subr.mxu0 0.0
    %1255 = vmatpush1.msra.mxu0 %v1203
    %1256 = vmatprep.subr.mxu0 0.0
    %1257 = vmatpush1.msra.mxu0 %v1202
    %1258 = vmatprep.subr.mxu0 0.0
    %1259 = vmatpush1.msra.mxu0 %v1201
    %1260 = vmatprep.subr.mxu0 0.0
    %1261 = vmatpush2.msra.mxu0 0.0
    %1262 = vmatprep.subr.mxu0 0.0
    %1263 = vmatpush2.msra.mxu0 0.0
    %1264 = vmatprep.subr.mxu0 0.0
    %1265 = vmatpush2.msra.mxu0 0.0
    %1266 = vmatprep.subr.mxu0 0.0
    %1267 = vmatpush2.msra.mxu0 0.0
    %1268 = vmatprep.subr.mxu0 0.0
    %1269 = vmatpush2.msra.mxu0 0.0
    %1270 = vmatprep.subr.mxu0 0.0
    %1271 = vmatpush2.msra.mxu0 0.0
    %1272 = vmatprep.subr.mxu0 0.0
    %1273 = vmatpush2.msra.mxu0 0.0
    %1274 = vmatprep.subr.mxu0 0.0
    %1275 = vmatpush2.msra.mxu0 0.0
    %1276 = vmatprep.subr.mxu0 0.0
    %1277 = vmatpush2.msra.mxu0 0.0
    %1278 = vmatprep.subr.mxu0 0.0
    %1279 = vmatpush2.msra.mxu0 0.0
    %1280 = vmatprep.subr.mxu0 0.0
    %1281 = vmatpush2.msra.mxu0 0.0
    %1282 = vmatprep.subr.mxu0 0.0
    %1283 = vmatpush2.msra.mxu0 0.0
    %1284 = vmatprep.subr.mxu0 0.0
    %1285 = vmatpush2.msra.mxu0 %v1220
    %1286 = vmatprep.subr.mxu0 0.0
    %1287 = vmatpush2.msra.mxu0 %v1219
    %1288 = vmatprep.subr.mxu0 0.0
    %1289 = vmatpush2.msra.mxu0 %v1218
    %1290 = vmatprep.subr.mxu0 0.0
    %1291 = vmatpush2.msra.mxu0 %v1217
    %1292 = vmatprep.mubr.f32.mxu0 %v1110
    %1293 = vmatmul.mubr.f32.gmra.mxu0 %v1064
    %v1294 = vpop.f32.mrf.mxu0
    %v1295 = vadd.f32 %v1226, %v1294
    %v1296 = vpop.f32.mrf.mxu0
    %1297 = vdwg.mxu0
    %vm1298 = vcmp.gt.f32.partialorder %v1295, 0.0
    %v1299 = vmul.f32 %v1295, 0.2
    %v1300 = vsel %vm1298, %v1295, %v1299
    %1301 = vst.msk [vmem:[#allocation5] sm:$0xff] %vm806, 0.0
    %1302 = vst.msk [vmem:[#allocation5 + $0x8] sm:$0xff] %vm806, 0.0
    %s1303 = scalar_lea.vmem [#allocation5], 24
    %1304 = vst.msk [vmem:[%s1303] sm:$0xff] %vm806, 0.0
    %1305 = vst.msk [vmem:[%s1303 + $0x8] sm:$0xff] %vm806, 0.0
    %s1306 = scalar_lea.vmem [#allocation5], 16
    %1307 = vst.msk [vmem:[%s1306] sm:$0xff] %vm806, %v1300
    %v1308 = vld [vmem:[#allocation5] sm:$0xff]
    %s1309 = scalar_lea.vmem [#allocation5], 8
    %v1310 = vld [vmem:[%s1309] sm:$0xff]
    %v1311 = vld [vmem:[%s1306] sm:$0xff]
    %v1312 = vld [vmem:[%s1303] sm:$0xff]
    %s1313 = scalar_lea.vmem [#allocation5], 32
    %v1314 = vld [vmem:[%s1313] sm:$0xff]
    %1316 = vrot.lane.b32.xlu0 %v1310, 32
    %v1317 = vpop.permute.xlu0 %1316
    %1320 = vrot.lane.b32.xlu0 %v1311, 64
    %v1321 = vpop.permute.xlu0 %1320
    %1324 = vrot.lane.b32.xlu0 %v1312, 96
    %v1325 = vpop.permute.xlu0 %1324
    %v1327 = vsel %vm806, %v1308, %v1317
    %v1328 = vsel %vm810, %v1327, %v1321
    %v1329 = vsel %vm1063, %v1328, %v1325
    %v1330 = vld [vmem:[%s37] sm:$0xff]
    %v1331 = vld [vmem:[%s37 + $0x8] sm:$0xff]
    %v1332 = vld [vmem:[%s37 + $0x10] sm:$0xff]
    %v1333 = vld [vmem:[%s37 + $0x18] sm:$0xff]
    %v1334 = vld [vmem:[%s37 + $0x20] sm:$0xff]
    %v1335 = vld [vmem:[%s37 + $0x28] sm:$0xff]
    %v1336 = vld [vmem:[%s37 + $0x30] sm:$0xff]
    %v1337 = vld [vmem:[%s37 + $0x38] sm:$0xff]
    %v1338 = vld [vmem:[%s41] sm:$0xff]
    %v1339 = vld [vmem:[%s41 + $0x8] sm:$0xff]
    %v1340 = vld [vmem:[%s41 + $0x10] sm:$0xff]
    %v1341 = vld [vmem:[%s41 + $0x18] sm:$0xff]
    %1343 = vset.pattern.permute.xlu0 0
    %1344 = vperm.xlu0 %1343, %v1338
    %v1345 = vpop.permute.xlu0 %1344
    %1348 = vset.pattern.permute.xlu0 0
    %1349 = vperm.xlu0 %1348, %v1339
    %v1350 = vpop.permute.xlu0 %1349
    %1353 = vset.pattern.permute.xlu0 0
    %1354 = vperm.xlu0 %1353, %v1340
    %v1355 = vpop.permute.xlu0 %1354
    %1358 = vset.pattern.permute.xlu0 0
    %1359 = vperm.xlu0 %1358, %v1341
    %v1360 = vpop.permute.xlu0 %1359
    %v1363 = vsel %vm806, %v1331, 0
    %v1366 = vsel %vm806, %v1333, 0
    %v1369 = vsel %vm806, %v1335, 0
    %v1372 = vsel %vm806, %v1337, 0
    %v1375 = vsel %vm806, %v1314, 0
    %1377 = vmatprep.subr.mxu0 0.0
    %1378 = vmatpush1.xpose.msra.mxu0 0.0
    %1379 = vmatprep.subr.mxu0 0.0
    %1380 = vmatpush1.xpose.msra.mxu0 0.0
    %1381 = vmatprep.subr.mxu0 0.0
    %1382 = vmatpush1.xpose.msra.mxu0 0.0
    %1383 = vmatprep.subr.mxu0 0.0
    %1384 = vmatpush1.xpose.msra.mxu0 0.0
    %1385 = vmatprep.subr.mxu0 0.0
    %1386 = vmatpush1.xpose.msra.mxu0 0.0
    %1387 = vmatprep.subr.mxu0 0.0
    %1388 = vmatpush1.xpose.msra.mxu0 0.0
    %1389 = vmatprep.subr.mxu0 0.0
    %1390 = vmatpush1.xpose.msra.mxu0 0.0
    %1391 = vmatprep.subr.mxu0 0.0
    %1392 = vmatpush1.xpose.msra.mxu0 0.0
    %1393 = vmatprep.subr.mxu0 0.0
    %1394 = vmatpush1.xpose.msra.mxu0 0.0
    %1395 = vmatprep.subr.mxu0 0.0
    %1396 = vmatpush1.xpose.msra.mxu0 0.0
    %1397 = vmatprep.subr.mxu0 0.0
    %1398 = vmatpush1.xpose.msra.mxu0 0.0
    %1399 = vmatprep.subr.mxu0 0.0
    %1400 = vmatpush1.xpose.msra.mxu0 0.0
    %1401 = vmatprep.subr.mxu0 0.0
    %1402 = vmatpush1.xpose.msra.mxu0 0.0
    %1403 = vmatprep.subr.mxu0 0.0
    %1404 = vmatpush1.xpose.msra.mxu0 0.0
    %1405 = vmatprep.subr.mxu0 0.0
    %1406 = vmatpush1.xpose.msra.mxu0 0.0
    %1407 = vmatprep.subr.mxu0 %v1375
    %1408 = vmatpush1.xpose.msra.mxu0 %v1329
    %1409 = vmatprep.subr.mxu0 0.0
    %1410 = vmatpush2.xpose.msra.mxu0 0.0
    %1411 = vmatprep.subr.mxu0 0.0
    %1412 = vmatpush2.xpose.msra.mxu0 0.0
    %1413 = vmatprep.subr.mxu0 0.0
    %1414 = vmatpush2.xpose.msra.mxu0 0.0
    %1415 = vmatprep.subr.mxu0 0.0
    %1416 = vmatpush2.xpose.msra.mxu0 0.0
    %1417 = vmatprep.subr.mxu0 0.0
    %1418 = vmatpush2.xpose.msra.mxu0 0.0
    %1419 = vmatprep.subr.mxu0 0.0
    %1420 = vmatpush2.xpose.msra.mxu0 0.0
    %1421 = vmatprep.subr.mxu0 0.0
    %1422 = vmatpush2.xpose.msra.mxu0 0.0
    %1423 = vmatprep.subr.mxu0 0.0
    %1424 = vmatpush2.xpose.msra.mxu0 0.0
    %1425 = vmatprep.subr.mxu0 0.0
    %1426 = vmatpush2.xpose.msra.mxu0 0.0
    %1427 = vmatprep.subr.mxu0 0.0
    %1428 = vmatpush2.xpose.msra.mxu0 0.0
    %1429 = vmatprep.subr.mxu0 0.0
    %1430 = vmatpush2.xpose.msra.mxu0 0.0
    %1431 = vmatprep.subr.mxu0 0.0
    %1432 = vmatpush2.xpose.msra.mxu0 0.0
    %1433 = vmatprep.subr.mxu0 0.0
    %1434 = vmatpush2.xpose.msra.mxu0 0.0
    %1435 = vmatprep.subr.mxu0 0.0
    %1436 = vmatpush2.xpose.msra.mxu0 0.0
    %1437 = vmatprep.subr.mxu0 0.0
    %1438 = vmatpush2.xpose.msra.mxu0 0.0
    %1439 = vmatprep.subr.mxu0 0.0
    %1440 = vmatpush2.xpose.msra.mxu0 0.0
    %1441 = vmatprep.mubr.f32.mxu0 %v1363
    %1442 = vmatmul.mubr.f32.gmra.mxu0 %v1330
    %v1443 = vpop.f32.mrf.mxu0
    %v1444 = vadd.f32 %v1345, %v1443
    %v1445 = vpop.f32.mrf.mxu0
    %1446 = vmatprep.mubr.f32.mxu0 %v1366
    %1447 = vmatmul.mubr.f32.gmra.mxu0 %v1332
    %v1448 = vpop.f32.mrf.mxu0
    %v1449 = vadd.f32 %v1350, %v1448
    %v1450 = vpop.f32.mrf.mxu0
    %1451 = vmatprep.mubr.f32.mxu0 %v1369
    %1452 = vmatmul.mubr.f32.gmra.mxu0 %v1334
    %v1453 = vpop.f32.mrf.mxu0
    %v1454 = vadd.f32 %v1355, %v1453
    %v1455 = vpop.f32.mrf.mxu0
    %1456 = vmatprep.mubr.f32.mxu0 %v1372
    %1457 = vmatmul.mubr.f32.gmra.mxu0 %v1336
    %v1458 = vpop.f32.mrf.mxu0
    %v1459 = vadd.f32 %v1360, %v1458
    %v1460 = vpop.f32.mrf.mxu0
    %1461 = vdwg.mxu0
    %1462 = vst.msk [vmem:[%s59] sm:$0xff] %vm566, %v1444
    %1463 = vst.msk [vmem:[%s59 + $0x8] sm:$0xff] %vm566, %v1449
    %1464 = vst.msk [vmem:[%s59 + $0x10] sm:$0xff] %vm566, %v1454
    %1465 = vst.msk [vmem:[%s59 + $0x18] sm:$0xff] %vm566, %v1459
    %v1466 = vld [vmem:[%s35] sm:$0xff]
    %v1467 = vld [vmem:[%s35 + $0x8] sm:$0xff]
    %v1468 = vld [vmem:[%s35 + $0x10] sm:$0xff]
    %v1469 = vld [vmem:[%s35 + $0x18] sm:$0xff]
    %v1470 = vld [vmem:[%s35 + $0x20] sm:$0xff]
    %v1471 = vld [vmem:[%s35 + $0x28] sm:$0xff]
    %v1472 = vld [vmem:[%s35 + $0x30] sm:$0xff]
    %v1473 = vld [vmem:[%s35 + $0x38] sm:$0xff]
    %v1474 = vld [vmem:[%s35 + $0x40] sm:$0xff]
    %v1475 = vld [vmem:[%s35 + $0x48] sm:$0xff]
    %v1476 = vld [vmem:[%s35 + $0x50] sm:$0xff]
    %v1477 = vld [vmem:[%s35 + $0x58] sm:$0xff]
    %v1478 = vld [vmem:[%s35 + $0x60] sm:$0xff]
    %v1479 = vld [vmem:[%s35 + $0x68] sm:$0xff]
    %v1480 = vld [vmem:[%s35 + $0x70] sm:$0xff]
    %v1481 = vld [vmem:[%s35 + $0x78] sm:$0xff]
    %v1482 = vld [vmem:[%s35 + $0x80] sm:$0xff]
    %v1483 = vld [vmem:[%s35 + $0x88] sm:$0xff]
    %v1484 = vld [vmem:[%s35 + $0x90] sm:$0xff]
    %v1485 = vld [vmem:[%s35 + $0x98] sm:$0xff]
    %v1486 = vld [vmem:[%s39] sm:$0x1]
    %v1488 = vlaneseq
    %v1489 = vshrl.u32 %v1488, 7
    %v1490 = vsub.s32 0, %v1489
    %v1491 = vrot.slane %v1486, %v1490
    %1493 = vmatprep.subr.mxu0 0.0
    %1494 = vmatpush1.msra.mxu0 %v1481
    %1495 = vmatprep.subr.mxu0 0.0
    %1496 = vmatpush1.msra.mxu0 %v1480
    %1497 = vmatprep.subr.mxu0 0.0
    %1498 = vmatpush1.msra.mxu0 %v1479
    %1499 = vmatprep.subr.mxu0 0.0
    %1500 = vmatpush1.msra.mxu0 %v1478
    %1501 = vmatprep.subr.mxu0 0.0
    %1502 = vmatpush1.msra.mxu0 %v1477
    %1503 = vmatprep.subr.mxu0 0.0
    %1504 = vmatpush1.msra.mxu0 %v1476
    %1505 = vmatprep.subr.mxu0 0.0
    %1506 = vmatpush1.msra.mxu0 %v1475
    %1507 = vmatprep.subr.mxu0 0.0
    %1508 = vmatpush1.msra.mxu0 %v1474
    %1509 = vmatprep.subr.mxu0 0.0
    %1510 = vmatpush1.msra.mxu0 %v1473
    %1511 = vmatprep.subr.mxu0 0.0
    %1512 = vmatpush1.msra.mxu0 %v1472
    %1513 = vmatprep.subr.mxu0 0.0
    %1514 = vmatpush1.msra.mxu0 %v1471
    %1515 = vmatprep.subr.mxu0 0.0
    %1516 = vmatpush1.msra.mxu0 %v1470
    %1517 = vmatprep.subr.mxu0 0.0
    %1518 = vmatpush1.msra.mxu0 %v1469
    %1519 = vmatprep.subr.mxu0 0.0
    %1520 = vmatpush1.msra.mxu0 %v1468
    %1521 = vmatprep.subr.mxu0 0.0
    %1522 = vmatpush1.msra.mxu0 %v1467
    %1523 = vmatprep.subr.mxu0 0.0
    %1524 = vmatpush1.msra.mxu0 %v1466
    %1525 = vmatprep.subr.mxu0 0.0
    %1526 = vmatpush2.msra.mxu0 0.0
    %1527 = vmatprep.subr.mxu0 0.0
    %1528 = vmatpush2.msra.mxu0 0.0
    %1529 = vmatprep.subr.mxu0 0.0
    %1530 = vmatpush2.msra.mxu0 0.0
    %1531 = vmatprep.subr.mxu0 0.0
    %1532 = vmatpush2.msra.mxu0 0.0
    %1533 = vmatprep.subr.mxu0 0.0
    %1534 = vmatpush2.msra.mxu0 0.0
    %1535 = vmatprep.subr.mxu0 0.0
    %1536 = vmatpush2.msra.mxu0 0.0
    %1537 = vmatprep.subr.mxu0 0.0
    %1538 = vmatpush2.msra.mxu0 0.0
    %1539 = vmatprep.subr.mxu0 0.0
    %1540 = vmatpush2.msra.mxu0 0.0
    %1541 = vmatprep.subr.mxu0 0.0
    %1542 = vmatpush2.msra.mxu0 0.0
    %1543 = vmatprep.subr.mxu0 0.0
    %1544 = vmatpush2.msra.mxu0 0.0
    %1545 = vmatprep.subr.mxu0 0.0
    %1546 = vmatpush2.msra.mxu0 0.0
    %1547 = vmatprep.subr.mxu0 0.0
    %1548 = vmatpush2.msra.mxu0 0.0
    %1549 = vmatprep.subr.mxu0 0.0
    %1550 = vmatpush2.msra.mxu0 %v1485
    %1551 = vmatprep.subr.mxu0 0.0
    %1552 = vmatpush2.msra.mxu0 %v1484
    %1553 = vmatprep.subr.mxu0 0.0
    %1554 = vmatpush2.msra.mxu0 %v1483
    %1555 = vmatprep.subr.mxu0 0.0
    %1556 = vmatpush2.msra.mxu0 %v1482
    %1557 = vmatprep.mubr.f32.mxu0 %v1375
    %1558 = vmatmul.mubr.f32.gmra.mxu0 %v1329
    %v1559 = vpop.f32.mrf.mxu0
    %v1560 = vadd.f32 %v1491, %v1559
    %v1561 = vpop.f32.mrf.mxu0
    %1562 = vdwg.mxu0
    %vm1563 = vcmp.gt.f32.partialorder %v1560, 0.0
    %v1564 = vmul.f32 %v1560, 0.2
    %v1565 = vsel %vm1563, %v1560, %v1564
    %1566 = vst.msk [vmem:[#allocation6] sm:$0xff] %vm806, 0.0
    %s1567 = scalar_lea.vmem [#allocation6], 16
    %1568 = vst.msk [vmem:[%s1567] sm:$0xff] %vm806, 0.0
    %s1569 = scalar_lea.vmem [#allocation6], 8
    %1570 = vst.msk [vmem:[%s1569] sm:$0xff] %vm806, %v1565
    %v1571 = vld [vmem:[#allocation6] sm:$0xff]
    %v1572 = vld [vmem:[%s1569] sm:$0xff]
    %v1573 = vld [vmem:[%s1567] sm:$0xff]
    %1575 = vrot.lane.b32.xlu0 %v1572, 32
    %v1576 = vpop.permute.xlu0 %1575
    %1579 = vrot.lane.b32.xlu0 %v1573, 64
    %v1580 = vpop.permute.xlu0 %1579
    %v1582 = vsel %vm806, %v1571, %v1576
    %v1583 = vsel %vm810, %v1582, %v1580
    %v1584 = vld [vmem:[%s45] sm:$0x1]
    %v1585 = vld [vmem:[#allocation8] sm:$0x1]
    %1587 = vset.pattern.permute.xlu0 0
    %1588 = vperm.xlu0 %1587, %v1585
    %v1589 = vpop.permute.xlu0 %1588
    %v1591 = vlaneseq
    %v1592 = vshrl.u32 %v1591, 7
    %v1593 = vsub.s32 0, %v1592
    %v1594 = vrot.slane %v1589, %v1593
    %v1596 = vsel %vm1063, %v1584, 0
    %v1599 = vsel %vm1063, %v1583, 0
    %1601 = vmatprep.subr.mxu0 0.0
    %1602 = vmatpush1.xpose.msra.mxu0 0.0
    %1603 = vmatprep.subr.mxu0 0.0
    %1604 = vmatpush1.xpose.msra.mxu0 0.0
    %1605 = vmatprep.subr.mxu0 0.0
    %1606 = vmatpush1.xpose.msra.mxu0 0.0
    %1607 = vmatprep.subr.mxu0 0.0
    %1608 = vmatpush1.xpose.msra.mxu0 0.0
    %1609 = vmatprep.subr.mxu0 0.0
    %1610 = vmatpush1.xpose.msra.mxu0 0.0
    %1611 = vmatprep.subr.mxu0 0.0
    %1612 = vmatpush1.xpose.msra.mxu0 0.0
    %1613 = vmatprep.subr.mxu0 0.0
    %1614 = vmatpush1.xpose.msra.mxu0 0.0
    %1615 = vmatprep.subr.mxu0 0.0
    %1616 = vmatpush1.xpose.msra.mxu0 0.0
    %1617 = vmatprep.subr.mxu0 0.0
    %1618 = vmatpush1.xpose.msra.mxu0 0.0
    %1619 = vmatprep.subr.mxu0 0.0
    %1620 = vmatpush1.xpose.msra.mxu0 0.0
    %1621 = vmatprep.subr.mxu0 0.0
    %1622 = vmatpush1.xpose.msra.mxu0 0.0
    %1623 = vmatprep.subr.mxu0 0.0
    %1624 = vmatpush1.xpose.msra.mxu0 0.0
    %1625 = vmatprep.subr.mxu0 0.0
    %1626 = vmatpush1.xpose.msra.mxu0 0.0
    %1627 = vmatprep.subr.mxu0 0.0
    %1628 = vmatpush1.xpose.msra.mxu0 0.0
    %1629 = vmatprep.subr.mxu0 0.0
    %1630 = vmatpush1.xpose.msra.mxu0 0.0
    %1631 = vmatprep.subr.mxu0 0.0
    %1632 = vmatpush1.xpose.msra.mxu0 %v1599
    %1633 = vmatprep.subr.mxu0 0.0
    %1634 = vmatpush2.xpose.msra.mxu0 0.0
    %1635 = vmatprep.subr.mxu0 0.0
    %1636 = vmatpush2.xpose.msra.mxu0 0.0
    %1637 = vmatprep.subr.mxu0 0.0
    %1638 = vmatpush2.xpose.msra.mxu0 0.0
    %1639 = vmatprep.subr.mxu0 0.0
    %1640 = vmatpush2.xpose.msra.mxu0 0.0
    %1641 = vmatprep.subr.mxu0 0.0
    %1642 = vmatpush2.xpose.msra.mxu0 0.0
    %1643 = vmatprep.subr.mxu0 0.0
    %1644 = vmatpush2.xpose.msra.mxu0 0.0
    %1645 = vmatprep.subr.mxu0 0.0
    %1646 = vmatpush2.xpose.msra.mxu0 0.0
    %1647 = vmatprep.subr.mxu0 0.0
    %1648 = vmatpush2.xpose.msra.mxu0 0.0
    %1649 = vmatprep.subr.mxu0 0.0
    %1650 = vmatpush2.xpose.msra.mxu0 0.0
    %1651 = vmatprep.subr.mxu0 0.0
    %1652 = vmatpush2.xpose.msra.mxu0 0.0
    %1653 = vmatprep.subr.mxu0 0.0
    %1654 = vmatpush2.xpose.msra.mxu0 0.0
    %1655 = vmatprep.subr.mxu0 0.0
    %1656 = vmatpush2.xpose.msra.mxu0 0.0
    %1657 = vmatprep.subr.mxu0 0.0
    %1658 = vmatpush2.xpose.msra.mxu0 0.0
    %1659 = vmatprep.subr.mxu0 0.0
    %1660 = vmatpush2.xpose.msra.mxu0 0.0
    %1661 = vmatprep.subr.mxu0 0.0
    %1662 = vmatpush2.xpose.msra.mxu0 0.0
    %1663 = vmatprep.subr.mxu0 0.0
    %1664 = vmatpush2.xpose.msra.mxu0 0.0
    %1665 = vmatprep.mubr.f32.mxu0 0.0
    %1666 = vmatmul.mubr.f32.gmra.mxu0 %v1596
    %v1667 = vpop.f32.mrf.mxu0
    %v1668 = vadd.f32 %v1594, %v1667
    %v1669 = vpop.f32.mrf.mxu0
    %1670 = vdwg.mxu0
    %vm1671 = vcmask 57344
    %1672 = vst.msk [vmem:[#allocation13] sm:$0x1] %vm1671, %v1668
    // Predicated region
    $region102: #{tpu_custom_call.1} parent=1 // pred_check
      _
    $region103: #{tpu_custom_call.1} parent=1 // pred_check_branch
      %1674 = sbr.rel (0) target = $region105
    $region104: #{tpu_custom_call.1} parent=1 // pred_region
      %s1676 = ssub.s32 64, 64
      %1677 = vsyncadd [#allocation10], %s1676
      %s1679 = sshll.u32 [#allocation9], 4
      %s1680 = int_to_ptr.vmem [resolvable:$true] %s1679
      %1682 = dma.vmem_to_hbm [thread:$0]  %s1680, 64, %s51, [#allocation10]
    $region105: #{tpu_custom_call.1} parent=1 // pred_fallthru
      _
    // Predicated region
    $region106: #{tpu_custom_call.1} parent=1 // pred_check
      _
    $region107: #{tpu_custom_call.1} parent=1 // pred_check_branch
      %1684 = sbr.rel (0) target = $region109
    $region108: #{tpu_custom_call.1} parent=1 // pred_region
      %s1686 = ssub.s32 256, 256
      %1687 = vsyncadd [#allocation12], %s1686
      %s1688 = sshll.u32 [#allocation11], 4
      %s1689 = int_to_ptr.vmem [resolvable:$true] %s1688
      %1694 = dma.vmem_to_hbm [thread:$0]  %s1689, 256, %s53, [#allocation12], 128, 128, 8
    $region109: #{tpu_custom_call.1} parent=1 // pred_fallthru
      _
    // Predicated region
    $region110: #{tpu_custom_call.1} parent=1 // pred_check
      _
    $region111: #{tpu_custom_call.1} parent=1 // pred_check_branch
      %1696 = sbr.rel (0) target = $region113
    $region112: #{tpu_custom_call.1} parent=1 // pred_region
      _
    $region113: #{tpu_custom_call.1} parent=1 // pred_fallthru
      _
    // Predicated region
    $region114: #{tpu_custom_call.1} parent=1 // pred_check
      _
    $region115: #{tpu_custom_call.1} parent=1 // pred_check_branch
      %1698 = sbr.rel (0) target = $region117
    $region116: #{tpu_custom_call.1} parent=1 // pred_region
      _
    $region117: #{tpu_custom_call.1} parent=1 // pred_fallthru
      _
    // Predicated region
    $region118: #{tpu_custom_call.1} parent=1 // pred_check
      _
    $region119: #{tpu_custom_call.1} parent=1 // pred_check_branch
      %1700 = sbr.rel (0) target = $region121
    $region120: #{tpu_custom_call.1} parent=1 // pred_region
      _
    $region121: #{tpu_custom_call.1} parent=1 // pred_fallthru
      _
    // Predicated region
    $region122: #{tpu_custom_call.1} parent=1 // pred_check
      _
    $region123: #{tpu_custom_call.1} parent=1 // pred_check_branch
      %1702 = sbr.rel (0) target = $region125
    $region124: #{tpu_custom_call.1} parent=1 // pred_region
      %s1704 = ssub.s32 16, 16
      %1705 = vsyncadd [#allocation12], %s1704
      %s1707 = sshll.u32 [#allocation13], 4
      %s1708 = int_to_ptr.vmem [resolvable:$true] %s1707
      %1710 = dma.vmem_to_hbm [thread:$0]  %s1708, 16, %s61, [#allocation12]
    $region125: #{tpu_custom_call.1} parent=1 // pred_fallthru
      _
    // Predicated region
    $region126: #{tpu_custom_call.1} parent=1 // pred_check
      _
    $region127: #{tpu_custom_call.1} parent=1 // pred_check_branch
      %1712 = sbr.rel (0) target = $region129
    $region128: #{tpu_custom_call.1} parent=1 // pred_region
      %1713 = dma.done [#allocation10], 64
    $region129: #{tpu_custom_call.1} parent=1 // pred_fallthru
      _
    // Predicated region
    $region130: #{tpu_custom_call.1} parent=1 // pred_check
      _
    $region131: #{tpu_custom_call.1} parent=1 // pred_check_branch
      %1715 = sbr.rel (0) target = $region133
    $region132: #{tpu_custom_call.1} parent=1 // pred_region
      %1716 = dma.done [#allocation12], 256
    $region133: #{tpu_custom_call.1} parent=1 // pred_fallthru
      _
    // Predicated region
    $region134: #{tpu_custom_call.1} parent=1 // pred_check
      _
    $region135: #{tpu_custom_call.1} parent=1 // pred_check_branch
      %1718 = sbr.rel (0) target = $region137
    $region136: #{tpu_custom_call.1} parent=1 // pred_region
      _
    $region137: #{tpu_custom_call.1} parent=1 // pred_fallthru
      _
    // Predicated region
    $region138: #{tpu_custom_call.1} parent=1 // pred_check
      _
    $region139: #{tpu_custom_call.1} parent=1 // pred_check_branch
      %1720 = sbr.rel (0) target = $region141
    $region140: #{tpu_custom_call.1} parent=1 // pred_region
      _
    $region141: #{tpu_custom_call.1} parent=1 // pred_fallthru
      _
    // Predicated region
    $region142: #{tpu_custom_call.1} parent=1 // pred_check
      _
    $region143: #{tpu_custom_call.1} parent=1 // pred_check_branch
      %1722 = sbr.rel (0) target = $region145
    $region144: #{tpu_custom_call.1} parent=1 // pred_region
      _
    $region145: #{tpu_custom_call.1} parent=1 // pred_fallthru
      _
    // Predicated region
    $region146: #{tpu_custom_call.1} parent=1 // pred_check
      _
    $region147: #{tpu_custom_call.1} parent=1 // pred_check_branch
      %1724 = sbr.rel (0) target = $region149
    $region148: #{tpu_custom_call.1} parent=1 // pred_region
      %1725 = dma.done [#allocation12], 16
    $region149: #{tpu_custom_call.1} parent=1 // pred_fallthru
      _
    %1726 = vsyncpa [#allocation10], 1
    %1727 = vsyncpa [#allocation12], 1

</llo_original>
